<compile_context>
chip_gen: v6e
topology: v6e:2x2x1
jax: 0.10.0
libtpu: 0.0.40
codegen_flags: <defaults>
</compile_context>

<pallas_src>
import math
import functools

import numpy as np
import jax
import jax.numpy as jnp
from jax import lax
from jax.experimental import pallas as pl
from jax.experimental.pallas import tpu as pltpu

# ---------------- model hyperparameters (small, consistent with module) -----
D_MODEL = 32
NHEAD = 4
D_HEAD = D_MODEL // NHEAD
DIM_FF = 64
EPS = 1e-5

T_LEN = 8    # target sequence length
S_LEN = 8    # memory sequence length
BATCH = 2

# ---------------- packed-parameter slab layouts ------------------------------
# Matrix slab: (row_offset, n_rows, n_cols); row offsets are multiples of 8
# (f32 sublane tile) and every section starts at lane 0.
_W_LAYOUT = {
    "wqkv_sa": (0,   D_MODEL, 3 * D_MODEL),
    "wo_sa":   (32,  D_MODEL, D_MODEL),
    "wq_ca":   (64,  D_MODEL, D_MODEL),
    "wkv_ca":  (96,  D_MODEL, 2 * D_MODEL),
    "wo_ca":   (128, D_MODEL, D_MODEL),
    "w1":      (160, D_MODEL, DIM_FF),
    "w2":      (192, DIM_FF,  D_MODEL),
}
_W_SLAB_SHAPE = (256, 128)

# Vector slab: (row, n_cols) -- one bias / LayerNorm vector per sublane row.
_V_LAYOUT = {
    "bqkv_sa": (0,  3 * D_MODEL),
    "bo_sa":   (1,  D_MODEL),
    "bq_ca":   (2,  D_MODEL),
    "bkv_ca":  (3,  2 * D_MODEL),
    "bo_ca":   (4,  D_MODEL),
    "b1":      (5,  DIM_FF),
    "b2":      (6,  D_MODEL),
    "g1":      (7,  D_MODEL),
    "be1":     (8,  D_MODEL),
    "g2":      (9,  D_MODEL),
    "be2":     (10, D_MODEL),
    "g3":      (11, D_MODEL),
    "be3":     (12, D_MODEL),
}
_V_SLAB_SHAPE = (16, 128)


# ---------------- Pallas kernel ----------------------------------------------
def _decoder_layer_kernel(tgt_ref, mem_ref, w_ref, v_ref, out_ref, attn_acc,
                          *, nhead, batch):
    nt, d_model = tgt_ref.shape          # nt = T * B  (rows are t-major, b-minor)
    ns = mem_ref.shape[0]                # ns = S * B
    d_head = d_model // nhead
    scale = 1.0 / math.sqrt(d_head)

    # Static slices of the packed slabs (each weight read exactly once, at use).
    def wmat(name):
        r0, nr, nc = _W_LAYOUT[name]
        return w_ref[r0:r0 + nr, 0:nc]

    def wvec(name):
        r, nc = _V_LAYOUT[name]
        return v_ref[r:r + 1, 0:nc]

    x = tgt_ref[...]                     # (T*B, D)
    mem = mem_ref[...]                   # (S*B, D)

    # Cross-batch masking bias: row n belongs to batch (n & (batch-1)) for
    # power-of-two batch (cheaper than %); computed once, shared when shapes match.
    def batch_bias(nq, nk):
        if batch & (batch - 1) == 0:
            rb = lax.broadcasted_iota(jnp.int32, (nq, nk), 0) & (batch - 1)
            cb = lax.broadcasted_iota(jnp.int32, (nq, nk), 1) & (batch - 1)
        else:
            rb = lax.broadcasted_iota(jnp.int32, (nq, nk), 0) % batch
            cb = lax.broadcasted_iota(jnp.int32, (nq, nk), 1) % batch
        return jnp.where(rb == cb, jnp.float32(0.0), jnp.float32(-1e30))

    bias_self = batch_bias(nt, nt)
    bias_cross = bias_self if ns == nt else batch_bias(nt, ns)

    def layer_norm(v, g, b):
        mu = jnp.mean(v, axis=-1, keepdims=True)
        var = jnp.mean((v - mu) ** 2, axis=-1, keepdims=True)
        return (v - mu) * lax.rsqrt(var + EPS) * g + b

    def attention(q_full, k_full, v_full, bias):
        # Per-head static lane slices fed straight into the MXU; each head's
        # (nt, d_head) output is stored at a static column offset into the
        # VMEM scratch accumulator (no stack / concatenate relayouts).
        qs = q_full * scale
        for h in range(nhead):
            sl = slice(h * d_head, (h + 1) * d_head)
            s = lax.dot_general(qs[:, sl], k_full[:, sl],
                                (((1,), (1,)), ((), ())),
                                preferred_element_type=jnp.float32) + bias
            s = s - jnp.max(s, axis=-1, keepdims=True)
            p = jnp.exp(s)
            p = p / jnp.sum(p, axis=-1, keepdims=True)   # exact softmax (parity)
            attn_acc[:, sl] = jnp.dot(p, v_full[:, sl],
                                      preferred_element_type=jnp.float32)
        return attn_acc[...]

    # ---- self-attention block (post-norm; dropout = identity at inference) ----
    qkv = jnp.dot(x, wmat("wqkv_sa"),
                  preferred_element_type=jnp.float32) + wvec("bqkv_sa")
    sa = attention(qkv[:, 0:d_model],
                   qkv[:, d_model:2 * d_model],
                   qkv[:, 2 * d_model:3 * d_model],
                   bias_self)
    sa = jnp.dot(sa, wmat("wo_sa"),
                 preferred_element_type=jnp.float32) + wvec("bo_sa")
    x = layer_norm(x + sa, wvec("g1"), wvec("be1"))

    # ---- cross-attention block -------------------------------------------------
    q = jnp.dot(x, wmat("wq_ca"),
                preferred_element_type=jnp.float32) + wvec("bq_ca")
    kv = jnp.dot(mem, wmat("wkv_ca"),
                 preferred_element_type=jnp.float32) + wvec("bkv_ca")
    ca = attention(q, kv[:, 0:d_model], kv[:, d_model:2 * d_model], bias_cross)
    ca = jnp.dot(ca, wmat("wo_ca"),
                 preferred_element_type=jnp.float32) + wvec("bo_ca")
    x = layer_norm(x + ca, wvec("g2"), wvec("be2"))

    # ---- feed-forward block (ReLU activation, default) --------------------------
    hdn = jnp.maximum(
        jnp.dot(x, wmat("w1"), preferred_element_type=jnp.float32) + wvec("b1"),
        0.0)
    ff = jnp.dot(hdn, wmat("w2"),
                 preferred_element_type=jnp.float32) + wvec("b2")
    x = layer_norm(x + ff, wvec("g3"), wvec("be3"))

    out_ref[...] = x.astype(out_ref.dtype)   # single (B*T, D) slab store


# ---------------- wrapper ------------------------------------------------------
def pack_params(params):
    """Pack the 18 parameters into two aligned f32 slabs (done once at init)."""
    w_slab = np.zeros(_W_SLAB_SHAPE, np.float32)
    for name, (r0, nr, nc) in _W_LAYOUT.items():
        w_slab[r0:r0 + nr, 0:nc] = np.asarray(params[name], np.float32)
    v_slab = np.zeros(_V_SLAB_SHAPE, np.float32)
    for name, (r, nc) in _V_LAYOUT.items():
        v_slab[r, 0:nc] = np.asarray(params[name], np.float32).reshape(nc)
    return jnp.asarray(w_slab), jnp.asarray(v_slab)


def transformer_decoder_layer(tgt_tbd, mem_sbd, w_slab, v_slab):
    """tgt: (T, B, D), memory: (S, B, D)  (batch_first=False)  ->  (T, B, D)."""
    T, B, D = tgt_tbd.shape
    S = mem_sbd.shape[0]
    nt, ns = T * B, S * B

    # Layout-preserving folds: row-major (T, B, D) == row-major (T*B, D).
    tgt2 = tgt_tbd.reshape(nt, D)
    mem2 = mem_sbd.reshape(ns, D)

    kernel = functools.partial(_decoder_layer_kernel, nhead=NHEAD, batch=B)

    # Advisory cost estimate (kernel is tiny & memory-light; helps XLA overlap it).
    flops = (2 * nt * D * (3 * D)                    # self-attn fused QKV proj
             + 2 * NHEAD * nt * nt * D_HEAD * 2      # self-attn scores + PV
             + 2 * nt * D * D                        # self-attn out proj
             + 2 * nt * D * D                        # cross-attn Q proj
             + 2 * ns * D * (2 * D)                  # cross-attn fused KV proj
             + 2 * NHEAD * nt * ns * D_HEAD * 2      # cross-attn scores + PV
             + 2 * nt * D * D                        # cross-attn out proj
             + 2 * nt * D * DIM_FF * 2)              # FFN
    transcendentals = NHEAD * (nt * nt + nt * ns) + 3 * nt
    bytes_accessed = 4 * (tgt2.size + mem2.size + w_slab.size + v_slab.size
                          + nt * D)
    cost = pl.CostEstimate(flops=int(flops),
                           transcendentals=int(transcendentals),
                           bytes_accessed=int(bytes_accessed))

    # Single invocation, no grid: all operands live whole in VMEM
    # (default whole-array blocks), total resident data << any VMEM limit.
    out2 = pl.pallas_call(
        kernel,
        out_shape=jax.ShapeDtypeStruct((nt, D), jnp.float32),
        scratch_shapes=[pltpu.VMEM((nt, D), jnp.float32)],  # per-head attn accum
        cost_estimate=cost,
    )(tgt2, mem2, w_slab, v_slab)

    return out2.reshape(T, B, D)


# ---------------- deterministic parameter init ---------------------------------
def init_params(key):
    def w(k, shape, scale=0.1):
        return scale * jax.random.normal(k, shape, dtype=jnp.float32)

    ks = jax.random.split(key, 14)
    return {
        # self-attention: packed qkv projection (D, 3D), out projection (D, D)
        "wqkv_sa": w(ks[0], (D_MODEL, 3 * D_MODEL)),
        "bqkv_sa": w(ks[1], (1, 3 * D_MODEL)),
        "wo_sa":   w(ks[2], (D_MODEL, D_MODEL)),
        "bo_sa":   w(ks[3], (1, D_MODEL)),
        # cross-attention: separate q (from tgt) and packed kv (from memory)
        "wq_ca":   w(ks[4], (D_MODEL, D_MODEL)),
        "bq_ca":   w(ks[5], (1, D_MODEL)),
        "wkv_ca":  w(ks[6], (D_MODEL, 2 * D_MODEL)),
        "bkv_ca":  w(ks[7], (1, 2 * D_MODEL)),
        "wo_ca":   w(ks[8], (D_MODEL, D_MODEL)),
        "bo_ca":   w(ks[9], (1, D_MODEL)),
        # feed-forward
        "w1": w(ks[10], (D_MODEL, DIM_FF)),
        "b1": w(ks[11], (1, DIM_FF)),
        "w2": w(ks[12], (DIM_FF, D_MODEL)),
        "b2": w(ks[13], (1, D_MODEL)),
        # layer norms (affine=True)
        "g1":  jnp.ones((1, D_MODEL), jnp.float32),
        "be1": jnp.zeros((1, D_MODEL), jnp.float32),
        "g2":  jnp.ones((1, D_MODEL), jnp.float32),
        "be2": jnp.zeros((1, D_MODEL), jnp.float32),
        "g3":  jnp.ones((1, D_MODEL), jnp.float32),
        "be3": jnp.zeros((1, D_MODEL), jnp.float32),
    }


if __name__ == "__main__":
    key = jax.random.PRNGKey(0)
    k_tgt, k_mem, k_par = jax.random.split(key, 3)

    # PyTorch batch_first=False convention: (seq, batch, d_model)
    tgt = jax.random.normal(k_tgt, (T_LEN, BATCH, D_MODEL), dtype=jnp.float32)
    mem = jax.random.normal(k_mem, (S_LEN, BATCH, D_MODEL), dtype=jnp.float32)
    params = init_params(k_par)
    w_slab, v_slab = pack_params(params)   # packed ONCE at init

    # TODO(synk): attn_mask / key_padding_mask, train-mode dropout, and the
    # batch/instance variants of `Norm` are not implemented (this is the
    # eval()-mode layer-norm path with masks=None).
    out = transformer_decoder_layer(tgt, mem, w_slab, v_slab)
    jax.block_until_ready(out)
    assert out.shape == (T_LEN, BATCH, D_MODEL)
    print("KERNEL_OK")
</pallas_src>

<mosaic_0001>
module attributes {stable_mosaic.version = 11 : i64} {
  func.func @_decoder_layer_kernel(%arg0: memref<16x32xf32, #tpu.memory_space<vmem>>, %arg1: memref<16x32xf32, #tpu.memory_space<vmem>>, %arg2: memref<256x128xf32, #tpu.memory_space<vmem>>, %arg3: memref<16x128xf32, #tpu.memory_space<vmem>>, %arg4: memref<16x32xf32, #tpu.memory_space<vmem>>, %arg5: memref<16x32xf32, #tpu.memory_space<vmem>>) attributes {dimension_semantics = [], scalar_prefetch = 0 : i64, scratch_operands = 1 : i64, tpu.core_type = #tpu.core_type<tc>} {
    %c0 = arith.constant 0 : index
    %c0_0 = arith.constant 0 : index
    %0 = vector.load %arg0[%c0, %c0_0] : memref<16x32xf32, #tpu.memory_space<vmem>>, vector<16x32xf32>
    %c0_1 = arith.constant 0 : index
    %c0_2 = arith.constant 0 : index
    %1 = vector.load %arg1[%c0_1, %c0_2] : memref<16x32xf32, #tpu.memory_space<vmem>>, vector<16x32xf32>
    %2 = tpu.iota {dimensions = array<i32: 0>} : vector<16x16xi32>
    %c1_i32 = arith.constant 1 : i32
    %3 = vector.broadcast %c1_i32 : i32 to vector<16x16xi32>
    %4 = arith.andi %2, %3 : vector<16x16xi32>
    %5 = tpu.iota {dimensions = array<i32: 1>} : vector<16x16xi32>
    %c1_i32_3 = arith.constant 1 : i32
    %6 = vector.broadcast %c1_i32_3 : i32 to vector<16x16xi32>
    %7 = arith.andi %5, %6 : vector<16x16xi32>
    %8 = arith.cmpi eq, %4, %7 : vector<16x16xi32>
    %cst = arith.constant 0.000000e+00 : f32
    %cst_4 = arith.constant -1.000000e+30 : f32
    %9 = vector.broadcast %cst : f32 to vector<16x16xf32>
    %10 = vector.broadcast %cst_4 : f32 to vector<16x16xf32>
    %11 = arith.select %8, %9, %10 : vector<16x16xi1>, vector<16x16xf32>
    %c0_5 = arith.constant 0 : index
    %c0_6 = arith.constant 0 : index
    %12 = vector.load %arg2[%c0_5, %c0_6] : memref<256x128xf32, #tpu.memory_space<vmem>>, vector<32x96xf32>
    %cst_7 = arith.constant dense<0.000000e+00> : vector<16x96xf32>
    %13 = tpu.matmul %0, %12, %cst_7 {dimension_numbers = #tpu.dot_dimension_numbers<[1], [0], [0], [1], [0, 0, 1, 1], [], []>} : vector<16x32xf32>, vector<32x96xf32>, vector<16x96xf32> -> vector<16x96xf32>
    %c0_8 = arith.constant 0 : index
    %c0_9 = arith.constant 0 : index
    %14 = vector.load %arg3[%c0_8, %c0_9] : memref<16x128xf32, #tpu.memory_space<vmem>>, vector<1x96xf32>
    %15 = vector.broadcast %14 : vector<1x96xf32> to vector<16x96xf32>
    %16 = arith.addf %13, %15 : vector<16x96xf32>
    %17 = vector.extract_strided_slice %16 {offsets = [0, 0], sizes = [16, 32], strides = [1, 1]} : vector<16x96xf32> to vector<16x32xf32>
    %18 = vector.extract_strided_slice %16 {offsets = [0, 32], sizes = [16, 32], strides = [1, 1]} : vector<16x96xf32> to vector<16x32xf32>
    %19 = vector.extract_strided_slice %16 {offsets = [0, 64], sizes = [16, 32], strides = [1, 1]} : vector<16x96xf32> to vector<16x32xf32>
    %cst_10 = arith.constant 0.353553385 : f32
    %20 = vector.broadcast %cst_10 : f32 to vector<16x32xf32>
    %21 = arith.mulf %17, %20 : vector<16x32xf32>
    %22 = vector.extract_strided_slice %21 {offsets = [0, 0], sizes = [16, 8], strides = [1, 1]} : vector<16x32xf32> to vector<16x8xf32>
    %23 = vector.extract_strided_slice %18 {offsets = [0, 0], sizes = [16, 8], strides = [1, 1]} : vector<16x32xf32> to vector<16x8xf32>
    %cst_11 = arith.constant dense<0.000000e+00> : vector<16x16xf32>
    %24 = tpu.matmul %22, %23, %cst_11 {dimension_numbers = #tpu.dot_dimension_numbers<[1], [1], [0], [0], [0, 0, 1, 0], [], []>} : vector<16x8xf32>, vector<16x8xf32>, vector<16x16xf32> -> vector<16x16xf32>
    %25 = arith.addf %24, %11 : vector<16x16xf32>
    %cst_12 = arith.constant dense<0xFF800000> : vector<16xf32>
    %26 = vector.multi_reduction <maximumf>, %25, %cst_12 [1] : vector<16x16xf32> to vector<16xf32>
    %27 = vector.shape_cast %26 : vector<16xf32> to vector<16x1xf32>
    %28 = vector.broadcast %27 : vector<16x1xf32> to vector<16x16xf32>
    %29 = arith.subf %25, %28 : vector<16x16xf32>
    %30 = math.exp %29 : vector<16x16xf32>
    %cst_13 = arith.constant dense<0.000000e+00> : vector<16xf32>
    %31 = vector.multi_reduction <add>, %30, %cst_13 [1] : vector<16x16xf32> to vector<16xf32>
    %32 = vector.shape_cast %31 : vector<16xf32> to vector<16x1xf32>
    %33 = vector.broadcast %32 : vector<16x1xf32> to vector<16x16xf32>
    %34 = arith.divf %30, %33 : vector<16x16xf32>
    %35 = vector.extract_strided_slice %19 {offsets = [0, 0], sizes = [16, 8], strides = [1, 1]} : vector<16x32xf32> to vector<16x8xf32>
    %cst_14 = arith.constant dense<0.000000e+00> : vector<16x8xf32>
    %36 = tpu.matmul %34, %35, %cst_14 {dimension_numbers = #tpu.dot_dimension_numbers<[1], [0], [0], [1], [0, 0, 1, 1], [], []>} : vector<16x16xf32>, vector<16x8xf32>, vector<16x8xf32> -> vector<16x8xf32>
    %c0_15 = arith.constant 0 : index
    %c0_16 = arith.constant 0 : index
    %37 = vector.load %arg5[%c0_15, %c0_16] : memref<16x32xf32, #tpu.memory_space<vmem>>, vector<16x8xf32>
    tpu.vector_store %arg5[%c0_15, %c0_16], %36 {strides = array<i32>} : memref<16x32xf32, #tpu.memory_space<vmem>>, vector<16x8xf32>,
    %38 = vector.extract_strided_slice %21 {offsets = [0, 8], sizes = [16, 8], strides = [1, 1]} : vector<16x32xf32> to vector<16x8xf32>
    %39 = vector.extract_strided_slice %18 {offsets = [0, 8], sizes = [16, 8], strides = [1, 1]} : vector<16x32xf32> to vector<16x8xf32>
    %cst_17 = arith.constant dense<0.000000e+00> : vector<16x16xf32>
    %40 = tpu.matmul %38, %39, %cst_17 {dimension_numbers = #tpu.dot_dimension_numbers<[1], [1], [0], [0], [0, 0, 1, 0], [], []>} : vector<16x8xf32>, vector<16x8xf32>, vector<16x16xf32> -> vector<16x16xf32>
    %41 = arith.addf %40, %11 : vector<16x16xf32>
    %cst_18 = arith.constant dense<0xFF800000> : vector<16xf32>
    %42 = vector.multi_reduction <maximumf>, %41, %cst_18 [1] : vector<16x16xf32> to vector<16xf32>
    %43 = vector.shape_cast %42 : vector<16xf32> to vector<16x1xf32>
    %44 = vector.broadcast %43 : vector<16x1xf32> to vector<16x16xf32>
    %45 = arith.subf %41, %44 : vector<16x16xf32>
    %46 = math.exp %45 : vector<16x16xf32>
    %cst_19 = arith.constant dense<0.000000e+00> : vector<16xf32>
    %47 = vector.multi_reduction <add>, %46, %cst_19 [1] : vector<16x16xf32> to vector<16xf32>
    %48 = vector.shape_cast %47 : vector<16xf32> to vector<16x1xf32>
    %49 = vector.broadcast %48 : vector<16x1xf32> to vector<16x16xf32>
    %50 = arith.divf %46, %49 : vector<16x16xf32>
    %51 = vector.extract_strided_slice %19 {offsets = [0, 8], sizes = [16, 8], strides = [1, 1]} : vector<16x32xf32> to vector<16x8xf32>
    %cst_20 = arith.constant dense<0.000000e+00> : vector<16x8xf32>
    %52 = tpu.matmul %50, %51, %cst_20 {dimension_numbers = #tpu.dot_dimension_numbers<[1], [0], [0], [1], [0, 0, 1, 1], [], []>} : vector<16x16xf32>, vector<16x8xf32>, vector<16x8xf32> -> vector<16x8xf32>
    %c0_21 = arith.constant 0 : index
    %c8 = arith.constant 8 : index
    %53 = vector.load %arg5[%c0_21, %c8] : memref<16x32xf32, #tpu.memory_space<vmem>>, vector<16x8xf32>
    tpu.vector_store %arg5[%c0_21, %c8], %52 {strides = array<i32>} : memref<16x32xf32, #tpu.memory_space<vmem>>, vector<16x8xf32>,
    %54 = vector.extract_strided_slice %21 {offsets = [0, 16], sizes = [16, 8], strides = [1, 1]} : vector<16x32xf32> to vector<16x8xf32>
    %55 = vector.extract_strided_slice %18 {offsets = [0, 16], sizes = [16, 8], strides = [1, 1]} : vector<16x32xf32> to vector<16x8xf32>
    %cst_22 = arith.constant dense<0.000000e+00> : vector<16x16xf32>
    %56 = tpu.matmul %54, %55, %cst_22 {dimension_numbers = #tpu.dot_dimension_numbers<[1], [1], [0], [0], [0, 0, 1, 0], [], []>} : vector<16x8xf32>, vector<16x8xf32>, vector<16x16xf32> -> vector<16x16xf32>
    %57 = arith.addf %56, %11 : vector<16x16xf32>
    %cst_23 = arith.constant dense<0xFF800000> : vector<16xf32>
    %58 = vector.multi_reduction <maximumf>, %57, %cst_23 [1] : vector<16x16xf32> to vector<16xf32>
    %59 = vector.shape_cast %58 : vector<16xf32> to vector<16x1xf32>
    %60 = vector.broadcast %59 : vector<16x1xf32> to vector<16x16xf32>
    %61 = arith.subf %57, %60 : vector<16x16xf32>
    %62 = math.exp %61 : vector<16x16xf32>
    %cst_24 = arith.constant dense<0.000000e+00> : vector<16xf32>
    %63 = vector.multi_reduction <add>, %62, %cst_24 [1] : vector<16x16xf32> to vector<16xf32>
    %64 = vector.shape_cast %63 : vector<16xf32> to vector<16x1xf32>
    %65 = vector.broadcast %64 : vector<16x1xf32> to vector<16x16xf32>
    %66 = arith.divf %62, %65 : vector<16x16xf32>
    %67 = vector.extract_strided_slice %19 {offsets = [0, 16], sizes = [16, 8], strides = [1, 1]} : vector<16x32xf32> to vector<16x8xf32>
    %cst_25 = arith.constant dense<0.000000e+00> : vector<16x8xf32>
    %68 = tpu.matmul %66, %67, %cst_25 {dimension_numbers = #tpu.dot_dimension_numbers<[1], [0], [0], [1], [0, 0, 1, 1], [], []>} : vector<16x16xf32>, vector<16x8xf32>, vector<16x8xf32> -> vector<16x8xf32>
    %c0_26 = arith.constant 0 : index
    %c16 = arith.constant 16 : index
    %69 = vector.load %arg5[%c0_26, %c16] : memref<16x32xf32, #tpu.memory_space<vmem>>, vector<16x8xf32>
    tpu.vector_store %arg5[%c0_26, %c16], %68 {strides = array<i32>} : memref<16x32xf32, #tpu.memory_space<vmem>>, vector<16x8xf32>,
    %70 = vector.extract_strided_slice %21 {offsets = [0, 24], sizes = [16, 8], strides = [1, 1]} : vector<16x32xf32> to vector<16x8xf32>
    %71 = vector.extract_strided_slice %18 {offsets = [0, 24], sizes = [16, 8], strides = [1, 1]} : vector<16x32xf32> to vector<16x8xf32>
    %cst_27 = arith.constant dense<0.000000e+00> : vector<16x16xf32>
    %72 = tpu.matmul %70, %71, %cst_27 {dimension_numbers = #tpu.dot_dimension_numbers<[1], [1], [0], [0], [0, 0, 1, 0], [], []>} : vector<16x8xf32>, vector<16x8xf32>, vector<16x16xf32> -> vector<16x16xf32>
    %73 = arith.addf %72, %11 : vector<16x16xf32>
    %cst_28 = arith.constant dense<0xFF800000> : vector<16xf32>
    %74 = vector.multi_reduction <maximumf>, %73, %cst_28 [1] : vector<16x16xf32> to vector<16xf32>
    %75 = vector.shape_cast %74 : vector<16xf32> to vector<16x1xf32>
    %76 = vector.broadcast %75 : vector<16x1xf32> to vector<16x16xf32>
    %77 = arith.subf %73, %76 : vector<16x16xf32>
    %78 = math.exp %77 : vector<16x16xf32>
    %cst_29 = arith.constant dense<0.000000e+00> : vector<16xf32>
    %79 = vector.multi_reduction <add>, %78, %cst_29 [1] : vector<16x16xf32> to vector<16xf32>
    %80 = vector.shape_cast %79 : vector<16xf32> to vector<16x1xf32>
    %81 = vector.broadcast %80 : vector<16x1xf32> to vector<16x16xf32>
    %82 = arith.divf %78, %81 : vector<16x16xf32>
    %83 = vector.extract_strided_slice %19 {offsets = [0, 24], sizes = [16, 8], strides = [1, 1]} : vector<16x32xf32> to vector<16x8xf32>
    %cst_30 = arith.constant dense<0.000000e+00> : vector<16x8xf32>
    %84 = tpu.matmul %82, %83, %cst_30 {dimension_numbers = #tpu.dot_dimension_numbers<[1], [0], [0], [1], [0, 0, 1, 1], [], []>} : vector<16x16xf32>, vector<16x8xf32>, vector<16x8xf32> -> vector<16x8xf32>
    %c0_31 = arith.constant 0 : index
    %c24 = arith.constant 24 : index
    %85 = vector.load %arg5[%c0_31, %c24] : memref<16x32xf32, #tpu.memory_space<vmem>>, vector<16x8xf32>
    tpu.vector_store %arg5[%c0_31, %c24], %84 {strides = array<i32>} : memref<16x32xf32, #tpu.memory_space<vmem>>, vector<16x8xf32>,
    %c0_32 = arith.constant 0 : index
    %c0_33 = arith.constant 0 : index
    %86 = vector.load %arg5[%c0_32, %c0_33] : memref<16x32xf32, #tpu.memory_space<vmem>>, vector<16x32xf32>
    %c32 = arith.constant 32 : index
    %c0_34 = arith.constant 0 : index
    %87 = vector.load %arg2[%c32, %c0_34] : memref<256x128xf32, #tpu.memory_space<vmem>>, vector<32x32xf32>
    %cst_35 = arith.constant dense<0.000000e+00> : vector<16x32xf32>
    %88 = tpu.matmul %86, %87, %cst_35 {dimension_numbers = #tpu.dot_dimension_numbers<[1], [0], [0], [1], [0, 0, 1, 1], [], []>} : vector<16x32xf32>, vector<32x32xf32>, vector<16x32xf32> -> vector<16x32xf32>
    %c1 = arith.constant 1 : index
    %c0_36 = arith.constant 0 : index
    %89 = vector.load %arg3[%c1, %c0_36] : memref<16x128xf32, #tpu.memory_space<vmem>>, vector<1x32xf32>
    %90 = vector.broadcast %89 : vector<1x32xf32> to vector<16x32xf32>
    %91 = arith.addf %88, %90 : vector<16x32xf32>
    %92 = arith.addf %0, %91 : vector<16x32xf32>
    %c7 = arith.constant 7 : index
    %c0_37 = arith.constant 0 : index
    %93 = vector.load %arg3[%c7, %c0_37] : memref<16x128xf32, #tpu.memory_space<vmem>>, vector<1x32xf32>
    %c8_38 = arith.constant 8 : index
    %c0_39 = arith.constant 0 : index
    %94 = vector.load %arg3[%c8_38, %c0_39] : memref<16x128xf32, #tpu.memory_space<vmem>>, vector<1x32xf32>
    %cst_40 = arith.constant dense<0.000000e+00> : vector<16xf32>
    %95 = vector.multi_reduction <add>, %92, %cst_40 [1] : vector<16x32xf32> to vector<16xf32>
    %96 = vector.shape_cast %95 : vector<16xf32> to vector<16x1xf32>
    %cst_41 = arith.constant 3.200000e+01 : f32
    %97 = vector.broadcast %cst_41 : f32 to vector<16x1xf32>
    %98 = arith.divf %96, %97 : vector<16x1xf32>
    %99 = vector.broadcast %98 : vector<16x1xf32> to vector<16x32xf32>
    %100 = arith.subf %92, %99 : vector<16x32xf32>
    %101 = arith.mulf %100, %100 : vector<16x32xf32>
    %cst_42 = arith.constant dense<0.000000e+00> : vector<16xf32>
    %102 = vector.multi_reduction <add>, %101, %cst_42 [1] : vector<16x32xf32> to vector<16xf32>
    %103 = vector.shape_cast %102 : vector<16xf32> to vector<16x1xf32>
    %cst_43 = arith.constant 3.200000e+01 : f32
    %104 = vector.broadcast %cst_43 : f32 to vector<16x1xf32>
    %105 = arith.divf %103, %104 : vector<16x1xf32>
    %106 = vector.broadcast %98 : vector<16x1xf32> to vector<16x32xf32>
    %107 = arith.subf %92, %106 : vector<16x32xf32>
    %cst_44 = arith.constant 9.99999974E-6 : f32
    %108 = vector.broadcast %cst_44 : f32 to vector<16x1xf32>
    %109 = arith.addf %105, %108 : vector<16x1xf32>
    %110 = math.rsqrt %109 : vector<16x1xf32>
    %111 = vector.broadcast %110 : vector<16x1xf32> to vector<16x32xf32>
    %112 = arith.mulf %107, %111 : vector<16x32xf32>
    %113 = vector.broadcast %93 : vector<1x32xf32> to vector<16x32xf32>
    %114 = arith.mulf %112, %113 : vector<16x32xf32>
    %115 = vector.broadcast %94 : vector<1x32xf32> to vector<16x32xf32>
    %116 = arith.addf %114, %115 : vector<16x32xf32>
    %c64 = arith.constant 64 : index
    %c0_45 = arith.constant 0 : index
    %117 = vector.load %arg2[%c64, %c0_45] : memref<256x128xf32, #tpu.memory_space<vmem>>, vector<32x32xf32>
    %cst_46 = arith.constant dense<0.000000e+00> : vector<16x32xf32>
    %118 = tpu.matmul %116, %117, %cst_46 {dimension_numbers = #tpu.dot_dimension_numbers<[1], [0], [0], [1], [0, 0, 1, 1], [], []>} : vector<16x32xf32>, vector<32x32xf32>, vector<16x32xf32> -> vector<16x32xf32>
    %c2 = arith.constant 2 : index
    %c0_47 = arith.constant 0 : index
    %119 = vector.load %arg3[%c2, %c0_47] : memref<16x128xf32, #tpu.memory_space<vmem>>, vector<1x32xf32>
    %120 = vector.broadcast %119 : vector<1x32xf32> to vector<16x32xf32>
    %121 = arith.addf %118, %120 : vector<16x32xf32>
    %c96 = arith.constant 96 : index
    %c0_48 = arith.constant 0 : index
    %122 = vector.load %arg2[%c96, %c0_48] : memref<256x128xf32, #tpu.memory_space<vmem>>, vector<32x64xf32>
    %cst_49 = arith.constant dense<0.000000e+00> : vector<16x64xf32>
    %123 = tpu.matmul %1, %122, %cst_49 {dimension_numbers = #tpu.dot_dimension_numbers<[1], [0], [0], [1], [0, 0, 1, 1], [], []>} : vector<16x32xf32>, vector<32x64xf32>, vector<16x64xf32> -> vector<16x64xf32>
    %c3 = arith.constant 3 : index
    %c0_50 = arith.constant 0 : index
    %124 = vector.load %arg3[%c3, %c0_50] : memref<16x128xf32, #tpu.memory_space<vmem>>, vector<1x64xf32>
    %125 = vector.broadcast %124 : vector<1x64xf32> to vector<16x64xf32>
    %126 = arith.addf %123, %125 : vector<16x64xf32>
    %127 = vector.extract_strided_slice %126 {offsets = [0, 0], sizes = [16, 32], strides = [1, 1]} : vector<16x64xf32> to vector<16x32xf32>
    %128 = vector.extract_strided_slice %126 {offsets = [0, 32], sizes = [16, 32], strides = [1, 1]} : vector<16x64xf32> to vector<16x32xf32>
    %cst_51 = arith.constant 0.353553385 : f32
    %129 = vector.broadcast %cst_51 : f32 to vector<16x32xf32>
    %130 = arith.mulf %121, %129 : vector<16x32xf32>
    %131 = vector.extract_strided_slice %130 {offsets = [0, 0], sizes = [16, 8], strides = [1, 1]} : vector<16x32xf32> to vector<16x8xf32>
    %132 = vector.extract_strided_slice %127 {offsets = [0, 0], sizes = [16, 8], strides = [1, 1]} : vector<16x32xf32> to vector<16x8xf32>
    %cst_52 = arith.constant dense<0.000000e+00> : vector<16x16xf32>
    %133 = tpu.matmul %131, %132, %cst_52 {dimension_numbers = #tpu.dot_dimension_numbers<[1], [1], [0], [0], [0, 0, 1, 0], [], []>} : vector<16x8xf32>, vector<16x8xf32>, vector<16x16xf32> -> vector<16x16xf32>
    %134 = arith.addf %133, %11 : vector<16x16xf32>
    %cst_53 = arith.constant dense<0xFF800000> : vector<16xf32>
    %135 = vector.multi_reduction <maximumf>, %134, %cst_53 [1] : vector<16x16xf32> to vector<16xf32>
    %136 = vector.shape_cast %135 : vector<16xf32> to vector<16x1xf32>
    %137 = vector.broadcast %136 : vector<16x1xf32> to vector<16x16xf32>
    %138 = arith.subf %134, %137 : vector<16x16xf32>
    %139 = math.exp %138 : vector<16x16xf32>
    %cst_54 = arith.constant dense<0.000000e+00> : vector<16xf32>
    %140 = vector.multi_reduction <add>, %139, %cst_54 [1] : vector<16x16xf32> to vector<16xf32>
    %141 = vector.shape_cast %140 : vector<16xf32> to vector<16x1xf32>
    %142 = vector.broadcast %141 : vector<16x1xf32> to vector<16x16xf32>
    %143 = arith.divf %139, %142 : vector<16x16xf32>
    %144 = vector.extract_strided_slice %128 {offsets = [0, 0], sizes = [16, 8], strides = [1, 1]} : vector<16x32xf32> to vector<16x8xf32>
    %cst_55 = arith.constant dense<0.000000e+00> : vector<16x8xf32>
    %145 = tpu.matmul %143, %144, %cst_55 {dimension_numbers = #tpu.dot_dimension_numbers<[1], [0], [0], [1], [0, 0, 1, 1], [], []>} : vector<16x16xf32>, vector<16x8xf32>, vector<16x8xf32> -> vector<16x8xf32>
    %c0_56 = arith.constant 0 : index
    %c0_57 = arith.constant 0 : index
    %146 = vector.load %arg5[%c0_56, %c0_57] : memref<16x32xf32, #tpu.memory_space<vmem>>, vector<16x8xf32>
    tpu.vector_store %arg5[%c0_56, %c0_57], %145 {strides = array<i32>} : memref<16x32xf32, #tpu.memory_space<vmem>>, vector<16x8xf32>,
    %147 = vector.extract_strided_slice %130 {offsets = [0, 8], sizes = [16, 8], strides = [1, 1]} : vector<16x32xf32> to vector<16x8xf32>
    %148 = vector.extract_strided_slice %127 {offsets = [0, 8], sizes = [16, 8], strides = [1, 1]} : vector<16x32xf32> to vector<16x8xf32>
    %cst_58 = arith.constant dense<0.000000e+00> : vector<16x16xf32>
    %149 = tpu.matmul %147, %148, %cst_58 {dimension_numbers = #tpu.dot_dimension_numbers<[1], [1], [0], [0], [0, 0, 1, 0], [], []>} : vector<16x8xf32>, vector<16x8xf32>, vector<16x16xf32> -> vector<16x16xf32>
    %150 = arith.addf %149, %11 : vector<16x16xf32>
    %cst_59 = arith.constant dense<0xFF800000> : vector<16xf32>
    %151 = vector.multi_reduction <maximumf>, %150, %cst_59 [1] : vector<16x16xf32> to vector<16xf32>
    %152 = vector.shape_cast %151 : vector<16xf32> to vector<16x1xf32>
    %153 = vector.broadcast %152 : vector<16x1xf32> to vector<16x16xf32>
    %154 = arith.subf %150, %153 : vector<16x16xf32>
    %155 = math.exp %154 : vector<16x16xf32>
    %cst_60 = arith.constant dense<0.000000e+00> : vector<16xf32>
    %156 = vector.multi_reduction <add>, %155, %cst_60 [1] : vector<16x16xf32> to vector<16xf32>
    %157 = vector.shape_cast %156 : vector<16xf32> to vector<16x1xf32>
    %158 = vector.broadcast %157 : vector<16x1xf32> to vector<16x16xf32>
    %159 = arith.divf %155, %158 : vector<16x16xf32>
    %160 = vector.extract_strided_slice %128 {offsets = [0, 8], sizes = [16, 8], strides = [1, 1]} : vector<16x32xf32> to vector<16x8xf32>
    %cst_61 = arith.constant dense<0.000000e+00> : vector<16x8xf32>
    %161 = tpu.matmul %159, %160, %cst_61 {dimension_numbers = #tpu.dot_dimension_numbers<[1], [0], [0], [1], [0, 0, 1, 1], [], []>} : vector<16x16xf32>, vector<16x8xf32>, vector<16x8xf32> -> vector<16x8xf32>
    %c0_62 = arith.constant 0 : index
    %c8_63 = arith.constant 8 : index
    %162 = vector.load %arg5[%c0_62, %c8_63] : memref<16x32xf32, #tpu.memory_space<vmem>>, vector<16x8xf32>
    tpu.vector_store %arg5[%c0_62, %c8_63], %161 {strides = array<i32>} : memref<16x32xf32, #tpu.memory_space<vmem>>, vector<16x8xf32>,
    %163 = vector.extract_strided_slice %130 {offsets = [0, 16], sizes = [16, 8], strides = [1, 1]} : vector<16x32xf32> to vector<16x8xf32>
    %164 = vector.extract_strided_slice %127 {offsets = [0, 16], sizes = [16, 8], strides = [1, 1]} : vector<16x32xf32> to vector<16x8xf32>
    %cst_64 = arith.constant dense<0.000000e+00> : vector<16x16xf32>
    %165 = tpu.matmul %163, %164, %cst_64 {dimension_numbers = #tpu.dot_dimension_numbers<[1], [1], [0], [0], [0, 0, 1, 0], [], []>} : vector<16x8xf32>, vector<16x8xf32>, vector<16x16xf32> -> vector<16x16xf32>
    %166 = arith.addf %165, %11 : vector<16x16xf32>
    %cst_65 = arith.constant dense<0xFF800000> : vector<16xf32>
    %167 = vector.multi_reduction <maximumf>, %166, %cst_65 [1] : vector<16x16xf32> to vector<16xf32>
    %168 = vector.shape_cast %167 : vector<16xf32> to vector<16x1xf32>
    %169 = vector.broadcast %168 : vector<16x1xf32> to vector<16x16xf32>
    %170 = arith.subf %166, %169 : vector<16x16xf32>
    %171 = math.exp %170 : vector<16x16xf32>
    %cst_66 = arith.constant dense<0.000000e+00> : vector<16xf32>
    %172 = vector.multi_reduction <add>, %171, %cst_66 [1] : vector<16x16xf32> to vector<16xf32>
    %173 = vector.shape_cast %172 : vector<16xf32> to vector<16x1xf32>
    %174 = vector.broadcast %173 : vector<16x1xf32> to vector<16x16xf32>
    %175 = arith.divf %171, %174 : vector<16x16xf32>
    %176 = vector.extract_strided_slice %128 {offsets = [0, 16], sizes = [16, 8], strides = [1, 1]} : vector<16x32xf32> to vector<16x8xf32>
    %cst_67 = arith.constant dense<0.000000e+00> : vector<16x8xf32>
    %177 = tpu.matmul %175, %176, %cst_67 {dimension_numbers = #tpu.dot_dimension_numbers<[1], [0], [0], [1], [0, 0, 1, 1], [], []>} : vector<16x16xf32>, vector<16x8xf32>, vector<16x8xf32> -> vector<16x8xf32>
    %c0_68 = arith.constant 0 : index
    %c16_69 = arith.constant 16 : index
    %178 = vector.load %arg5[%c0_68, %c16_69] : memref<16x32xf32, #tpu.memory_space<vmem>>, vector<16x8xf32>
    tpu.vector_store %arg5[%c0_68, %c16_69], %177 {strides = array<i32>} : memref<16x32xf32, #tpu.memory_space<vmem>>, vector<16x8xf32>,
    %179 = vector.extract_strided_slice %130 {offsets = [0, 24], sizes = [16, 8], strides = [1, 1]} : vector<16x32xf32> to vector<16x8xf32>
    %180 = vector.extract_strided_slice %127 {offsets = [0, 24], sizes = [16, 8], strides = [1, 1]} : vector<16x32xf32> to vector<16x8xf32>
    %cst_70 = arith.constant dense<0.000000e+00> : vector<16x16xf32>
    %181 = tpu.matmul %179, %180, %cst_70 {dimension_numbers = #tpu.dot_dimension_numbers<[1], [1], [0], [0], [0, 0, 1, 0], [], []>} : vector<16x8xf32>, vector<16x8xf32>, vector<16x16xf32> -> vector<16x16xf32>
    %182 = arith.addf %181, %11 : vector<16x16xf32>
    %cst_71 = arith.constant dense<0xFF800000> : vector<16xf32>
    %183 = vector.multi_reduction <maximumf>, %182, %cst_71 [1] : vector<16x16xf32> to vector<16xf32>
    %184 = vector.shape_cast %183 : vector<16xf32> to vector<16x1xf32>
    %185 = vector.broadcast %184 : vector<16x1xf32> to vector<16x16xf32>
    %186 = arith.subf %182, %185 : vector<16x16xf32>
    %187 = math.exp %186 : vector<16x16xf32>
    %cst_72 = arith.constant dense<0.000000e+00> : vector<16xf32>
    %188 = vector.multi_reduction <add>, %187, %cst_72 [1] : vector<16x16xf32> to vector<16xf32>
    %189 = vector.shape_cast %188 : vector<16xf32> to vector<16x1xf32>
    %190 = vector.broadcast %189 : vector<16x1xf32> to vector<16x16xf32>
    %191 = arith.divf %187, %190 : vector<16x16xf32>
    %192 = vector.extract_strided_slice %128 {offsets = [0, 24], sizes = [16, 8], strides = [1, 1]} : vector<16x32xf32> to vector<16x8xf32>
    %cst_73 = arith.constant dense<0.000000e+00> : vector<16x8xf32>
    %193 = tpu.matmul %191, %192, %cst_73 {dimension_numbers = #tpu.dot_dimension_numbers<[1], [0], [0], [1], [0, 0, 1, 1], [], []>} : vector<16x16xf32>, vector<16x8xf32>, vector<16x8xf32> -> vector<16x8xf32>
    %c0_74 = arith.constant 0 : index
    %c24_75 = arith.constant 24 : index
    %194 = vector.load %arg5[%c0_74, %c24_75] : memref<16x32xf32, #tpu.memory_space<vmem>>, vector<16x8xf32>
    tpu.vector_store %arg5[%c0_74, %c24_75], %193 {strides = array<i32>} : memref<16x32xf32, #tpu.memory_space<vmem>>, vector<16x8xf32>,
    %c0_76 = arith.constant 0 : index
    %c0_77 = arith.constant 0 : index
    %195 = vector.load %arg5[%c0_76, %c0_77] : memref<16x32xf32, #tpu.memory_space<vmem>>, vector<16x32xf32>
    %c128 = arith.constant 128 : index
    %c0_78 = arith.constant 0 : index
    %196 = vector.load %arg2[%c128, %c0_78] : memref<256x128xf32, #tpu.memory_space<vmem>>, vector<32x32xf32>
    %cst_79 = arith.constant dense<0.000000e+00> : vector<16x32xf32>
    %197 = tpu.matmul %195, %196, %cst_79 {dimension_numbers = #tpu.dot_dimension_numbers<[1], [0], [0], [1], [0, 0, 1, 1], [], []>} : vector<16x32xf32>, vector<32x32xf32>, vector<16x32xf32> -> vector<16x32xf32>
    %c4 = arith.constant 4 : index
    %c0_80 = arith.constant 0 : index
    %198 = vector.load %arg3[%c4, %c0_80] : memref<16x128xf32, #tpu.memory_space<vmem>>, vector<1x32xf32>
    %199 = vector.broadcast %198 : vector<1x32xf32> to vector<16x32xf32>
    %200 = arith.addf %197, %199 : vector<16x32xf32>
    %201 = arith.addf %116, %200 : vector<16x32xf32>
    %c9 = arith.constant 9 : index
    %c0_81 = arith.constant 0 : index
    %202 = vector.load %arg3[%c9, %c0_81] : memref<16x128xf32, #tpu.memory_space<vmem>>, vector<1x32xf32>
    %c10 = arith.constant 10 : index
    %c0_82 = arith.constant 0 : index
    %203 = vector.load %arg3[%c10, %c0_82] : memref<16x128xf32, #tpu.memory_space<vmem>>, vector<1x32xf32>
    %cst_83 = arith.constant dense<0.000000e+00> : vector<16xf32>
    %204 = vector.multi_reduction <add>, %201, %cst_83 [1] : vector<16x32xf32> to vector<16xf32>
    %205 = vector.shape_cast %204 : vector<16xf32> to vector<16x1xf32>
    %cst_84 = arith.constant 3.200000e+01 : f32
    %206 = vector.broadcast %cst_84 : f32 to vector<16x1xf32>
    %207 = arith.divf %205, %206 : vector<16x1xf32>
    %208 = vector.broadcast %207 : vector<16x1xf32> to vector<16x32xf32>
    %209 = arith.subf %201, %208 : vector<16x32xf32>
    %210 = arith.mulf %209, %209 : vector<16x32xf32>
    %cst_85 = arith.constant dense<0.000000e+00> : vector<16xf32>
    %211 = vector.multi_reduction <add>, %210, %cst_85 [1] : vector<16x32xf32> to vector<16xf32>
    %212 = vector.shape_cast %211 : vector<16xf32> to vector<16x1xf32>
    %cst_86 = arith.constant 3.200000e+01 : f32
    %213 = vector.broadcast %cst_86 : f32 to vector<16x1xf32>
    %214 = arith.divf %212, %213 : vector<16x1xf32>
    %215 = vector.broadcast %207 : vector<16x1xf32> to vector<16x32xf32>
    %216 = arith.subf %201, %215 : vector<16x32xf32>
    %cst_87 = arith.constant 9.99999974E-6 : f32
    %217 = vector.broadcast %cst_87 : f32 to vector<16x1xf32>
    %218 = arith.addf %214, %217 : vector<16x1xf32>
    %219 = math.rsqrt %218 : vector<16x1xf32>
    %220 = vector.broadcast %219 : vector<16x1xf32> to vector<16x32xf32>
    %221 = arith.mulf %216, %220 : vector<16x32xf32>
    %222 = vector.broadcast %202 : vector<1x32xf32> to vector<16x32xf32>
    %223 = arith.mulf %221, %222 : vector<16x32xf32>
    %224 = vector.broadcast %203 : vector<1x32xf32> to vector<16x32xf32>
    %225 = arith.addf %223, %224 : vector<16x32xf32>
    %c160 = arith.constant 160 : index
    %c0_88 = arith.constant 0 : index
    %226 = vector.load %arg2[%c160, %c0_88] : memref<256x128xf32, #tpu.memory_space<vmem>>, vector<32x64xf32>
    %cst_89 = arith.constant dense<0.000000e+00> : vector<16x64xf32>
    %227 = tpu.matmul %225, %226, %cst_89 {dimension_numbers = #tpu.dot_dimension_numbers<[1], [0], [0], [1], [0, 0, 1, 1], [], []>} : vector<16x32xf32>, vector<32x64xf32>, vector<16x64xf32> -> vector<16x64xf32>
    %c5 = arith.constant 5 : index
    %c0_90 = arith.constant 0 : index
    %228 = vector.load %arg3[%c5, %c0_90] : memref<16x128xf32, #tpu.memory_space<vmem>>, vector<1x64xf32>
    %229 = vector.broadcast %228 : vector<1x64xf32> to vector<16x64xf32>
    %230 = arith.addf %227, %229 : vector<16x64xf32>
    %cst_91 = arith.constant 0.000000e+00 : f32
    %231 = vector.broadcast %cst_91 : f32 to vector<16x64xf32>
    %232 = arith.maximumf %230, %231 : vector<16x64xf32>
    %c192 = arith.constant 192 : index
    %c0_92 = arith.constant 0 : index
    %233 = vector.load %arg2[%c192, %c0_92] : memref<256x128xf32, #tpu.memory_space<vmem>>, vector<64x32xf32>
    %cst_93 = arith.constant dense<0.000000e+00> : vector<16x32xf32>
    %234 = tpu.matmul %232, %233, %cst_93 {dimension_numbers = #tpu.dot_dimension_numbers<[1], [0], [0], [1], [0, 0, 1, 1], [], []>} : vector<16x64xf32>, vector<64x32xf32>, vector<16x32xf32> -> vector<16x32xf32>
    %c6 = arith.constant 6 : index
    %c0_94 = arith.constant 0 : index
    %235 = vector.load %arg3[%c6, %c0_94] : memref<16x128xf32, #tpu.memory_space<vmem>>, vector<1x32xf32>
    %236 = vector.broadcast %235 : vector<1x32xf32> to vector<16x32xf32>
    %237 = arith.addf %234, %236 : vector<16x32xf32>
    %238 = arith.addf %225, %237 : vector<16x32xf32>
    %c11 = arith.constant 11 : index
    %c0_95 = arith.constant 0 : index
    %239 = vector.load %arg3[%c11, %c0_95] : memref<16x128xf32, #tpu.memory_space<vmem>>, vector<1x32xf32>
    %c12 = arith.constant 12 : index
    %c0_96 = arith.constant 0 : index
    %240 = vector.load %arg3[%c12, %c0_96] : memref<16x128xf32, #tpu.memory_space<vmem>>, vector<1x32xf32>
    %cst_97 = arith.constant dense<0.000000e+00> : vector<16xf32>
    %241 = vector.multi_reduction <add>, %238, %cst_97 [1] : vector<16x32xf32> to vector<16xf32>
    %242 = vector.shape_cast %241 : vector<16xf32> to vector<16x1xf32>
    %cst_98 = arith.constant 3.200000e+01 : f32
    %243 = vector.broadcast %cst_98 : f32 to vector<16x1xf32>
    %244 = arith.divf %242, %243 : vector<16x1xf32>
    %245 = vector.broadcast %244 : vector<16x1xf32> to vector<16x32xf32>
    %246 = arith.subf %238, %245 : vector<16x32xf32>
    %247 = arith.mulf %246, %246 : vector<16x32xf32>
    %cst_99 = arith.constant dense<0.000000e+00> : vector<16xf32>
    %248 = vector.multi_reduction <add>, %247, %cst_99 [1] : vector<16x32xf32> to vector<16xf32>
    %249 = vector.shape_cast %248 : vector<16xf32> to vector<16x1xf32>
    %cst_100 = arith.constant 3.200000e+01 : f32
    %250 = vector.broadcast %cst_100 : f32 to vector<16x1xf32>
    %251 = arith.divf %249, %250 : vector<16x1xf32>
    %252 = vector.broadcast %244 : vector<16x1xf32> to vector<16x32xf32>
    %253 = arith.subf %238, %252 : vector<16x32xf32>
    %cst_101 = arith.constant 9.99999974E-6 : f32
    %254 = vector.broadcast %cst_101 : f32 to vector<16x1xf32>
    %255 = arith.addf %251, %254 : vector<16x1xf32>
    %256 = math.rsqrt %255 : vector<16x1xf32>
    %257 = vector.broadcast %256 : vector<16x1xf32> to vector<16x32xf32>
    %258 = arith.mulf %253, %257 : vector<16x32xf32>
    %259 = vector.broadcast %239 : vector<1x32xf32> to vector<16x32xf32>
    %260 = arith.mulf %258, %259 : vector<16x32xf32>
    %261 = vector.broadcast %240 : vector<1x32xf32> to vector<16x32xf32>
    %262 = arith.addf %260, %261 : vector<16x32xf32>
    %c0_102 = arith.constant 0 : index
    %c0_103 = arith.constant 0 : index
    %263 = vector.load %arg4[%c0_102, %c0_103] : memref<16x32xf32, #tpu.memory_space<vmem>>, vector<16x32xf32>
    tpu.vector_store %arg4[%c0_102, %c0_103], %262 {strides = array<i32>} : memref<16x32xf32, #tpu.memory_space<vmem>>, vector<16x32xf32>,
    return
  }
}

</mosaic_0001>

<llo_original>
// kernel: tpu_custom_call.1
$region0: #{tpu_custom_call.1}
  #allocation0 [shape = 'u32[]', space=smem, size = 0x4, offset = 0x4, fixed_abs, tag = 'smem constant byte address 0x4 - core index']
  #allocation1 [shape = 'u32[144,128]{1,0:T(1,128)}', space=vmem, size = 0x12000, scoped, tag = 'internal scratch']
  #allocation2 [shape = 'f32[16,32]{1,0:T(8,128)}', space=vmem, size = 0x2000, scoped, tag = 'scratch operand']
  %s0 = inlined_call_operand.hbm [shape: f32[16,32], index: 0, kind: input, shape index: {}]
  %s1 = inlined_call_operand.hbm [shape: f32[16,32], index: 1, kind: input, shape index: {}]
  %s2 = inlined_call_operand.hbm [shape: f32[256,128], index: 2, kind: input, shape index: {}]
  %s3 = inlined_call_operand.hbm [shape: f32[16,128], index: 3, kind: input, shape index: {}]
  %s4 = inlined_call_operand.hbm [shape: f32[16,32], index: 4, kind: output, shape index: {}]
  %s5 = sld [smem:[#allocation0]]
  $region42: #{tpu_custom_call.1} parent=0
    _
  %s7 = ssub.s32 1, %s5
  %s8 = scalar_select 0, %s7, %s5
  $region1: #{tpu_custom_call.1} parent=0
    #allocation3 [shape = 'u8[8192]{0}', space=vmem, size = 0x2000, scoped, tag = 'input window, operand 0, single buffered']
    #allocation4 [shape = 's32[1]{0}', space=sflag, size = 0x4, scoped, tag = 'scoped memory for tpu_custom_call.1']
    #allocation5 [shape = 's32[1]{0}', space=sflag, size = 0x4, scoped, tag = 'scoped memory for tpu_custom_call.1']
    #allocation6 [shape = 'u8[8192]{0}', space=vmem, size = 0x2000, scoped, tag = 'input window, operand 1, single buffered']
    #allocation7 [shape = 's32[1]{0}', space=sflag, size = 0x4, scoped, tag = 'scoped memory for tpu_custom_call.1']
    #allocation8 [shape = 'u8[131072]{0}', space=vmem, size = 0x20000, scoped, tag = 'input window, operand 2, single buffered']
    #allocation9 [shape = 'u8[8192]{0}', space=vmem, size = 0x2000, scoped, tag = 'input window, operand 3, single buffered']
    #allocation10 [shape = 's32[1]{0}', space=sflag, size = 0x4, scoped, tag = 'scoped memory for tpu_custom_call.1']
    #allocation11 [shape = 'u8[8192]{0}', space=vmem, size = 0x2000, scoped, tag = 'output window, operand 0, single buffered']
    %9 = vsyncpa [#allocation4], 0
    %10 = vsyncpa [#allocation7], 0
    %11 = vsyncpa [#allocation10], 0
    %12 = vsyncpa [#allocation5], 0
    // Predicated region
    $region2: #{tpu_custom_call.1} parent=1 // pred_check
      _
    $region3: #{tpu_custom_call.1} parent=1 // pred_check_branch
      %14 = sbr.rel (0) target = $region5
    $region4: #{tpu_custom_call.1} parent=1 // pred_region
      %s16 = ssub.s32 256, 256
      %17 = vsyncadd [#allocation4], %s16
      %s18 = sshll.u32 [#allocation3], 4
      %s19 = int_to_ptr.vmem [resolvable:$true] %s18
      %24 = dma.hbm_to_vmem [thread:$0]  %s0, 256, %s19, [#allocation4], 128, 128, 8
    $region5: #{tpu_custom_call.1} parent=1 // pred_fallthru
      _
    // Predicated region
    $region6: #{tpu_custom_call.1} parent=1 // pred_check
      _
    $region7: #{tpu_custom_call.1} parent=1 // pred_check_branch
      %26 = sbr.rel (0) target = $region9
    $region8: #{tpu_custom_call.1} parent=1 // pred_region
      %s28 = ssub.s32 256, 256
      %29 = vsyncadd [#allocation7], %s28
      %s30 = sshll.u32 [#allocation6], 4
      %s31 = int_to_ptr.vmem [resolvable:$true] %s30
      %36 = dma.hbm_to_vmem [thread:$0]  %s1, 256, %s31, [#allocation7], 128, 128, 8
    $region9: #{tpu_custom_call.1} parent=1 // pred_fallthru
      _
    // Predicated region
    $region10: #{tpu_custom_call.1} parent=1 // pred_check
      _
    $region11: #{tpu_custom_call.1} parent=1 // pred_check_branch
      %38 = sbr.rel (0) target = $region13
    $region12: #{tpu_custom_call.1} parent=1 // pred_region
      %s40 = ssub.s32 4096, 4096
      %41 = vsyncadd [#allocation7], %s40
      %s42 = sshll.u32 [#allocation8], 4
      %s43 = int_to_ptr.vmem [resolvable:$true] %s42
      %48 = dma.hbm_to_vmem [thread:$0]  %s2, 4096, %s43, [#allocation7], 128, 128, 8
    $region13: #{tpu_custom_call.1} parent=1 // pred_fallthru
      _
    // Predicated region
    $region14: #{tpu_custom_call.1} parent=1 // pred_check
      _
    $region15: #{tpu_custom_call.1} parent=1 // pred_check_branch
      %50 = sbr.rel (0) target = $region17
    $region16: #{tpu_custom_call.1} parent=1 // pred_region
      %s52 = ssub.s32 256, 256
      %53 = vsyncadd [#allocation10], %s52
      %s54 = sshll.u32 [#allocation9], 4
      %s55 = int_to_ptr.vmem [resolvable:$true] %s54
      %60 = dma.hbm_to_vmem [thread:$0]  %s3, 256, %s55, [#allocation10], 128, 128, 8
    $region17: #{tpu_custom_call.1} parent=1 // pred_fallthru
      _
    // Predicated region
    $region18: #{tpu_custom_call.1} parent=1 // pred_check
      _
    $region19: #{tpu_custom_call.1} parent=1 // pred_check_branch
      %62 = sbr.rel (0) target = $region21
    $region20: #{tpu_custom_call.1} parent=1 // pred_region
      %63 = dma.done [#allocation4], 256
    $region21: #{tpu_custom_call.1} parent=1 // pred_fallthru
      _
    // Predicated region
    $region22: #{tpu_custom_call.1} parent=1 // pred_check
      _
    $region23: #{tpu_custom_call.1} parent=1 // pred_check_branch
      %65 = sbr.rel (0) target = $region25
    $region24: #{tpu_custom_call.1} parent=1 // pred_region
      %66 = dma.done [#allocation7], 256
    $region25: #{tpu_custom_call.1} parent=1 // pred_fallthru
      _
    // Predicated region
    $region26: #{tpu_custom_call.1} parent=1 // pred_check
      _
    $region27: #{tpu_custom_call.1} parent=1 // pred_check_branch
      %68 = sbr.rel (0) target = $region29
    $region28: #{tpu_custom_call.1} parent=1 // pred_region
      %69 = dma.done [#allocation7], 4096
    $region29: #{tpu_custom_call.1} parent=1 // pred_fallthru
      _
    // Predicated region
    $region30: #{tpu_custom_call.1} parent=1 // pred_check
      _
    $region31: #{tpu_custom_call.1} parent=1 // pred_check_branch
      %71 = sbr.rel (0) target = $region33
    $region32: #{tpu_custom_call.1} parent=1 // pred_region
      %72 = dma.done [#allocation10], 256
    $region33: #{tpu_custom_call.1} parent=1 // pred_fallthru
      _
    %v73 = vld [vmem:[#allocation3] sm:$0xff]
    %v74 = vld [vmem:[#allocation3 + $0x8] sm:$0xff]
    %v75 = vld [vmem:[#allocation6] sm:$0xff]
    %v76 = vld [vmem:[#allocation6 + $0x8] sm:$0xff]
    %v77 = vlaneseq
    %v78 = vshrl.u32 %v77, 7
    %v79 = vadd.s32 %v78, 8
    %v80 = vand.u32 %v78, 1
    %v81 = vand.u32 %v79, 1
    %v82 = vlaneseq
    %v83 = vand.u32 %v82, 127
    %v84 = vand.u32 %v83, 1
    %vm85 = vcmp.eq.s32.totalorder %v80, %v84
    %vm86 = vcmp.eq.s32.totalorder %v81, %v84
    %v87 = vsel %vm85, 0.0, -1e+30
    %v88 = vsel %vm86, 0.0, -1e+30
    %v89 = vld [vmem:[#allocation8] sm:$0xff]
    %v90 = vld [vmem:[#allocation8 + $0x8] sm:$0xff]
    %v91 = vld [vmem:[#allocation8 + $0x10] sm:$0xff]
    %v92 = vld [vmem:[#allocation8 + $0x18] sm:$0xff]
    %v93 = vld [vmem:[#allocation9] sm:$0x1]
    %v94 = vlaneseq
    %v95 = vshrl.u32 %v94, 7
    %v96 = vsub.s32 0, %v95
    %v97 = vrot.slane %v93, %v96
    %vm98 = vcmask 261120
    %v100 = vsel %vm98, %v73, 0
    %v103 = vsel %vm98, %v74, 0
    %105 = vmatprep.subr.mxu0 0.0
    %106 = vmatpush1.msra.mxu0 0.0
    %107 = vmatprep.subr.mxu0 0.0
    %108 = vmatpush1.msra.mxu0 0.0
    %109 = vmatprep.subr.mxu0 0.0
    %110 = vmatpush1.msra.mxu0 0.0
    %111 = vmatprep.subr.mxu0 0.0
    %112 = vmatpush1.msra.mxu0 0.0
    %113 = vmatprep.subr.mxu0 0.0
    %114 = vmatpush1.msra.mxu0 0.0
    %115 = vmatprep.subr.mxu0 0.0
    %116 = vmatpush1.msra.mxu0 0.0
    %117 = vmatprep.subr.mxu0 0.0
    %118 = vmatpush1.msra.mxu0 0.0
    %119 = vmatprep.subr.mxu0 0.0
    %120 = vmatpush1.msra.mxu0 0.0
    %121 = vmatprep.subr.mxu0 0.0
    %122 = vmatpush1.msra.mxu0 0.0
    %123 = vmatprep.subr.mxu0 0.0
    %124 = vmatpush1.msra.mxu0 0.0
    %125 = vmatprep.subr.mxu0 0.0
    %126 = vmatpush1.msra.mxu0 0.0
    %127 = vmatprep.subr.mxu0 0.0
    %128 = vmatpush1.msra.mxu0 0.0
    %129 = vmatprep.subr.mxu0 0.0
    %130 = vmatpush1.msra.mxu0 %v92
    %131 = vmatprep.subr.mxu0 0.0
    %132 = vmatpush1.msra.mxu0 %v91
    %133 = vmatprep.subr.mxu0 0.0
    %134 = vmatpush1.msra.mxu0 %v90
    %135 = vmatprep.subr.mxu0 0.0
    %136 = vmatpush1.msra.mxu0 %v89
    %137 = vmatprep.subr.mxu0 0.0
    %138 = vmatpush2.msra.mxu0 0.0
    %139 = vmatprep.subr.mxu0 0.0
    %140 = vmatpush2.msra.mxu0 0.0
    %141 = vmatprep.subr.mxu0 0.0
    %142 = vmatpush2.msra.mxu0 0.0
    %143 = vmatprep.subr.mxu0 0.0
    %144 = vmatpush2.msra.mxu0 0.0
    %145 = vmatprep.subr.mxu0 0.0
    %146 = vmatpush2.msra.mxu0 0.0
    %147 = vmatprep.subr.mxu0 0.0
    %148 = vmatpush2.msra.mxu0 0.0
    %149 = vmatprep.subr.mxu0 0.0
    %150 = vmatpush2.msra.mxu0 0.0
    %151 = vmatprep.subr.mxu0 0.0
    %152 = vmatpush2.msra.mxu0 0.0
    %153 = vmatprep.subr.mxu0 0.0
    %154 = vmatpush2.msra.mxu0 0.0
    %155 = vmatprep.subr.mxu0 0.0
    %156 = vmatpush2.msra.mxu0 0.0
    %157 = vmatprep.subr.mxu0 0.0
    %158 = vmatpush2.msra.mxu0 0.0
    %159 = vmatprep.subr.mxu0 0.0
    %160 = vmatpush2.msra.mxu0 0.0
    %161 = vmatprep.subr.mxu0 0.0
    %162 = vmatpush2.msra.mxu0 0.0
    %163 = vmatprep.subr.mxu0 0.0
    %164 = vmatpush2.msra.mxu0 0.0
    %165 = vmatprep.subr.mxu0 0.0
    %166 = vmatpush2.msra.mxu0 0.0
    %167 = vmatprep.subr.mxu0 0.0
    %168 = vmatpush2.msra.mxu0 0.0
    %169 = vmatprep.mubr.f32.mxu0 0.0
    %170 = vmatmul.mubr.f32.gmra.mxu0 %v100
    %v171 = vpop.f32.mrf.mxu0
    %v172 = vadd.f32 %v97, %v171
    %v173 = vpop.f32.mrf.mxu0
    %174 = vmatprep.mubr.f32.mxu0 0.0
    %175 = vmatmul.mubr.f32.gmra.mxu0 %v103
    %v176 = vpop.f32.mrf.mxu0
    %v177 = vadd.f32 %v97, %v176
    %v178 = vpop.f32.mrf.mxu0
    %179 = vdwg.mxu0
    %v180 = vmul.f32 %v172, 0.35355338
    %v181 = vmul.f32 %v177, 0.35355338
    %184 = vrot.lane.b32.xlu0 %v172, 96
    %v185 = vpop.permute.xlu0 %184
    %186 = vrot.lane.b32.xlu0 %v177, 96
    %v187 = vpop.permute.xlu0 %186
    %vm188 = vcmask 64512
    %v190 = vsel %vm188, %v180, 0
    %v193 = vsel %vm188, %v181, 0
    %v195 = vsel %vm188, %v185, 0
    %v197 = vsel %vm188, %v187, 0
    %199 = vmatprep.subr.mxu0 0.0
    %200 = vmatpush1.xpose.msra.mxu0 0.0
    %201 = vmatprep.subr.mxu0 0.0
    %202 = vmatpush1.xpose.msra.mxu0 0.0
    %203 = vmatprep.subr.mxu0 0.0
    %204 = vmatpush1.xpose.msra.mxu0 0.0
    %205 = vmatprep.subr.mxu0 0.0
    %206 = vmatpush1.xpose.msra.mxu0 0.0
    %207 = vmatprep.subr.mxu0 0.0
    %208 = vmatpush1.xpose.msra.mxu0 0.0
    %209 = vmatprep.subr.mxu0 0.0
    %210 = vmatpush1.xpose.msra.mxu0 0.0
    %211 = vmatprep.subr.mxu0 0.0
    %212 = vmatpush1.xpose.msra.mxu0 0.0
    %213 = vmatprep.subr.mxu0 0.0
    %214 = vmatpush1.xpose.msra.mxu0 0.0
    %215 = vmatprep.subr.mxu0 0.0
    %216 = vmatpush1.xpose.msra.mxu0 0.0
    %217 = vmatprep.subr.mxu0 0.0
    %218 = vmatpush1.xpose.msra.mxu0 0.0
    %219 = vmatprep.subr.mxu0 0.0
    %220 = vmatpush1.xpose.msra.mxu0 0.0
    %221 = vmatprep.subr.mxu0 0.0
    %222 = vmatpush1.xpose.msra.mxu0 0.0
    %223 = vmatprep.subr.mxu0 0.0
    %224 = vmatpush1.xpose.msra.mxu0 0.0
    %225 = vmatprep.subr.mxu0 0.0
    %226 = vmatpush1.xpose.msra.mxu0 0.0
    %227 = vmatprep.subr.mxu0 0.0
    %228 = vmatpush1.xpose.msra.mxu0 %v197
    %229 = vmatprep.subr.mxu0 0.0
    %230 = vmatpush1.xpose.msra.mxu0 %v195
    %231 = vmatprep.subr.mxu0 0.0
    %232 = vmatpush2.xpose.msra.mxu0 0.0
    %233 = vmatprep.subr.mxu0 0.0
    %234 = vmatpush2.xpose.msra.mxu0 0.0
    %235 = vmatprep.subr.mxu0 0.0
    %236 = vmatpush2.xpose.msra.mxu0 0.0
    %237 = vmatprep.subr.mxu0 0.0
    %238 = vmatpush2.xpose.msra.mxu0 0.0
    %239 = vmatprep.subr.mxu0 0.0
    %240 = vmatpush2.xpose.msra.mxu0 0.0
    %241 = vmatprep.subr.mxu0 0.0
    %242 = vmatpush2.xpose.msra.mxu0 0.0
    %243 = vmatprep.subr.mxu0 0.0
    %244 = vmatpush2.xpose.msra.mxu0 0.0
    %245 = vmatprep.subr.mxu0 0.0
    %246 = vmatpush2.xpose.msra.mxu0 0.0
    %247 = vmatprep.subr.mxu0 0.0
    %248 = vmatpush2.xpose.msra.mxu0 0.0
    %249 = vmatprep.subr.mxu0 0.0
    %250 = vmatpush2.xpose.msra.mxu0 0.0
    %251 = vmatprep.subr.mxu0 0.0
    %252 = vmatpush2.xpose.msra.mxu0 0.0
    %253 = vmatprep.subr.mxu0 0.0
    %254 = vmatpush2.xpose.msra.mxu0 0.0
    %255 = vmatprep.subr.mxu0 0.0
    %256 = vmatpush2.xpose.msra.mxu0 0.0
    %257 = vmatprep.subr.mxu0 0.0
    %258 = vmatpush2.xpose.msra.mxu0 0.0
    %259 = vmatprep.subr.mxu0 0.0
    %260 = vmatpush2.xpose.msra.mxu0 0.0
    %261 = vmatprep.subr.mxu0 0.0
    %262 = vmatpush2.xpose.msra.mxu0 0.0
    %263 = vmatprep.mubr.f32.mxu0 0.0
    %264 = vmatmul.mubr.f32.gmra.mxu0 %v190
    %v265 = vpop.f32.mrf.mxu0
    %v266 = vadd.f32 %v87, %v265
    %v267 = vpop.f32.mrf.mxu0
    %268 = vmatprep.mubr.f32.mxu0 0.0
    %269 = vmatmul.mubr.f32.gmra.mxu0 %v193
    %v270 = vpop.f32.mrf.mxu0
    %v271 = vadd.f32 %v88, %v270
    %v272 = vpop.f32.mrf.mxu0
    %273 = vdwg.mxu0
    %vm274 = vcmask 130048
    %v275 = vsel %vm274, %v266, -inf
    %276 = vmax.xlane.f32.xlu0 %v275
    %v277 = vpop.xlane.xlu0 %276
    %v278 = vsel %vm274, %v271, -inf
    %279 = vmax.xlane.f32.xlu0 %v278
    %v280 = vpop.xlane.xlu0 %279
    %v281 = vsub.f32 %v266, %v277
    %v282 = vsub.f32 %v271, %v280
    %v283 = vmul.f32 %v281, 1.442695
    %v284 = vpow.pop %v283
    %v285 = vmul.f32 %v282, 1.442695
    %v286 = vpow.pop %v285
    %v287 = vsel %vm274, %v284, 0.0
    %288 = vadd.xlane.f32.xlu0 %v287
    %v289 = vpop.xlane.xlu0 %288
    %v290 = vsel %vm274, %v286, 0.0
    %291 = vadd.xlane.f32.xlu0 %v290
    %v292 = vpop.xlane.xlu0 %291
    %v293 = vrcp.pop %v289
    %v294 = vmul.f32 %v284, %v293
    %v295 = vrcp.pop %v292
    %v296 = vmul.f32 %v286, %v295
    %297 = vrot.lane.b32.xlu0 %v172, 64
    %v298 = vpop.permute.xlu0 %297
    %299 = vrot.lane.b32.xlu0 %v177, 64
    %v300 = vpop.permute.xlu0 %299
    %v304 = vsel %vm274, %v294, 0
    %v307 = vsel %vm274, %v296, 0
    %309 = vmatprep.subr.mxu0 0.0
    %310 = vmatpush1.msra.mxu0 0.0
    %311 = vmatprep.subr.mxu0 0.0
    %312 = vmatpush1.msra.mxu0 0.0
    %313 = vmatprep.subr.mxu0 0.0
    %314 = vmatpush1.msra.mxu0 0.0
    %315 = vmatprep.subr.mxu0 0.0
    %316 = vmatpush1.msra.mxu0 0.0
    %317 = vmatprep.subr.mxu0 0.0
    %318 = vmatpush1.msra.mxu0 0.0
    %319 = vmatprep.subr.mxu0 0.0
    %320 = vmatpush1.msra.mxu0 0.0
    %321 = vmatprep.subr.mxu0 0.0
    %322 = vmatpush1.msra.mxu0 0.0
    %323 = vmatprep.subr.mxu0 0.0
    %324 = vmatpush1.msra.mxu0 0.0
    %325 = vmatprep.subr.mxu0 0.0
    %326 = vmatpush1.msra.mxu0 0.0
    %327 = vmatprep.subr.mxu0 0.0
    %328 = vmatpush1.msra.mxu0 0.0
    %329 = vmatprep.subr.mxu0 0.0
    %330 = vmatpush1.msra.mxu0 0.0
    %331 = vmatprep.subr.mxu0 0.0
    %332 = vmatpush1.msra.mxu0 0.0
    %333 = vmatprep.subr.mxu0 0.0
    %334 = vmatpush1.msra.mxu0 0.0
    %335 = vmatprep.subr.mxu0 0.0
    %336 = vmatpush1.msra.mxu0 0.0
    %337 = vmatprep.subr.mxu0 0.0
    %338 = vmatpush1.msra.mxu0 %v300
    %339 = vmatprep.subr.mxu0 0.0
    %340 = vmatpush1.msra.mxu0 %v298
    %341 = vmatprep.subr.mxu0 0.0
    %342 = vmatpush2.msra.mxu0 0.0
    %343 = vmatprep.subr.mxu0 0.0
    %344 = vmatpush2.msra.mxu0 0.0
    %345 = vmatprep.subr.mxu0 0.0
    %346 = vmatpush2.msra.mxu0 0.0
    %347 = vmatprep.subr.mxu0 0.0
    %348 = vmatpush2.msra.mxu0 0.0
    %349 = vmatprep.subr.mxu0 0.0
    %350 = vmatpush2.msra.mxu0 0.0
    %351 = vmatprep.subr.mxu0 0.0
    %352 = vmatpush2.msra.mxu0 0.0
    %353 = vmatprep.subr.mxu0 0.0
    %354 = vmatpush2.msra.mxu0 0.0
    %355 = vmatprep.subr.mxu0 0.0
    %356 = vmatpush2.msra.mxu0 0.0
    %357 = vmatprep.subr.mxu0 0.0
    %358 = vmatpush2.msra.mxu0 0.0
    %359 = vmatprep.subr.mxu0 0.0
    %360 = vmatpush2.msra.mxu0 0.0
    %361 = vmatprep.subr.mxu0 0.0
    %362 = vmatpush2.msra.mxu0 0.0
    %363 = vmatprep.subr.mxu0 0.0
    %364 = vmatpush2.msra.mxu0 0.0
    %365 = vmatprep.subr.mxu0 0.0
    %366 = vmatpush2.msra.mxu0 0.0
    %367 = vmatprep.subr.mxu0 0.0
    %368 = vmatpush2.msra.mxu0 0.0
    %369 = vmatprep.subr.mxu0 0.0
    %370 = vmatpush2.msra.mxu0 0.0
    %371 = vmatprep.subr.mxu0 0.0
    %372 = vmatpush2.msra.mxu0 0.0
    %373 = vmatprep.mubr.f32.mxu0 0.0
    %374 = vmatmul.mubr.f32.gmra.mxu0 %v304
    %v375 = vpop.f32.mrf.mxu0
    %v376 = vadd.f32 0.0, %v375
    %v377 = vpop.f32.mrf.mxu0
    %378 = vmatprep.mubr.f32.mxu0 0.0
    %379 = vmatmul.mubr.f32.gmra.mxu0 %v307
    %v380 = vpop.f32.mrf.mxu0
    %v381 = vadd.f32 0.0, %v380
    %v382 = vpop.f32.mrf.mxu0
    %383 = vdwg.mxu0
    %384 = vst.msk [vmem:[#allocation2] sm:$0xff] %vm188, %v376
    %385 = vst.msk [vmem:[#allocation2 + $0x8] sm:$0xff] %vm188, %v381
    %386 = vrot.lane.b32.xlu0 %v180, 120
    %v387 = vpop.permute.xlu0 %386
    %388 = vrot.lane.b32.xlu0 %v181, 120
    %v389 = vpop.permute.xlu0 %388
    %390 = vrot.lane.b32.xlu0 %v172, 88
    %v391 = vpop.permute.xlu0 %390
    %392 = vrot.lane.b32.xlu0 %v177, 88
    %v393 = vpop.permute.xlu0 %392
    %v394 = vsel %vm188, %v387, 0
    %v396 = vsel %vm188, %v389, 0
    %v398 = vsel %vm188, %v391, 0
    %v400 = vsel %vm188, %v393, 0
    %402 = vmatprep.subr.mxu0 0.0
    %403 = vmatpush1.xpose.msra.mxu0 0.0
    %404 = vmatprep.subr.mxu0 0.0
    %405 = vmatpush1.xpose.msra.mxu0 0.0
    %406 = vmatprep.subr.mxu0 0.0
    %407 = vmatpush1.xpose.msra.mxu0 0.0
    %408 = vmatprep.subr.mxu0 0.0
    %409 = vmatpush1.xpose.msra.mxu0 0.0
    %410 = vmatprep.subr.mxu0 0.0
    %411 = vmatpush1.xpose.msra.mxu0 0.0
    %412 = vmatprep.subr.mxu0 0.0
    %413 = vmatpush1.xpose.msra.mxu0 0.0
    %414 = vmatprep.subr.mxu0 0.0
    %415 = vmatpush1.xpose.msra.mxu0 0.0
    %416 = vmatprep.subr.mxu0 0.0
    %417 = vmatpush1.xpose.msra.mxu0 0.0
    %418 = vmatprep.subr.mxu0 0.0
    %419 = vmatpush1.xpose.msra.mxu0 0.0
    %420 = vmatprep.subr.mxu0 0.0
    %421 = vmatpush1.xpose.msra.mxu0 0.0
    %422 = vmatprep.subr.mxu0 0.0
    %423 = vmatpush1.xpose.msra.mxu0 0.0
    %424 = vmatprep.subr.mxu0 0.0
    %425 = vmatpush1.xpose.msra.mxu0 0.0
    %426 = vmatprep.subr.mxu0 0.0
    %427 = vmatpush1.xpose.msra.mxu0 0.0
    %428 = vmatprep.subr.mxu0 0.0
    %429 = vmatpush1.xpose.msra.mxu0 0.0
    %430 = vmatprep.subr.mxu0 0.0
    %431 = vmatpush1.xpose.msra.mxu0 %v400
    %432 = vmatprep.subr.mxu0 0.0
    %433 = vmatpush1.xpose.msra.mxu0 %v398
    %434 = vmatprep.subr.mxu0 0.0
    %435 = vmatpush2.xpose.msra.mxu0 0.0
    %436 = vmatprep.subr.mxu0 0.0
    %437 = vmatpush2.xpose.msra.mxu0 0.0
    %438 = vmatprep.subr.mxu0 0.0
    %439 = vmatpush2.xpose.msra.mxu0 0.0
    %440 = vmatprep.subr.mxu0 0.0
    %441 = vmatpush2.xpose.msra.mxu0 0.0
    %442 = vmatprep.subr.mxu0 0.0
    %443 = vmatpush2.xpose.msra.mxu0 0.0
    %444 = vmatprep.subr.mxu0 0.0
    %445 = vmatpush2.xpose.msra.mxu0 0.0
    %446 = vmatprep.subr.mxu0 0.0
    %447 = vmatpush2.xpose.msra.mxu0 0.0
    %448 = vmatprep.subr.mxu0 0.0
    %449 = vmatpush2.xpose.msra.mxu0 0.0
    %450 = vmatprep.subr.mxu0 0.0
    %451 = vmatpush2.xpose.msra.mxu0 0.0
    %452 = vmatprep.subr.mxu0 0.0
    %453 = vmatpush2.xpose.msra.mxu0 0.0
    %454 = vmatprep.subr.mxu0 0.0
    %455 = vmatpush2.xpose.msra.mxu0 0.0
    %456 = vmatprep.subr.mxu0 0.0
    %457 = vmatpush2.xpose.msra.mxu0 0.0
    %458 = vmatprep.subr.mxu0 0.0
    %459 = vmatpush2.xpose.msra.mxu0 0.0
    %460 = vmatprep.subr.mxu0 0.0
    %461 = vmatpush2.xpose.msra.mxu0 0.0
    %462 = vmatprep.subr.mxu0 0.0
    %463 = vmatpush2.xpose.msra.mxu0 0.0
    %464 = vmatprep.subr.mxu0 0.0
    %465 = vmatpush2.xpose.msra.mxu0 0.0
    %466 = vmatprep.mubr.f32.mxu0 0.0
    %467 = vmatmul.mubr.f32.gmra.mxu0 %v394
    %v468 = vpop.f32.mrf.mxu0
    %v469 = vadd.f32 %v87, %v468
    %v470 = vpop.f32.mrf.mxu0
    %471 = vmatprep.mubr.f32.mxu0 0.0
    %472 = vmatmul.mubr.f32.gmra.mxu0 %v396
    %v473 = vpop.f32.mrf.mxu0
    %v474 = vadd.f32 %v88, %v473
    %v475 = vpop.f32.mrf.mxu0
    %476 = vdwg.mxu0
    %v477 = vsel %vm274, %v469, -inf
    %478 = vmax.xlane.f32.xlu0 %v477
    %v479 = vpop.xlane.xlu0 %478
    %v480 = vsel %vm274, %v474, -inf
    %481 = vmax.xlane.f32.xlu0 %v480
    %v482 = vpop.xlane.xlu0 %481
    %v483 = vsub.f32 %v469, %v479
    %v484 = vsub.f32 %v474, %v482
    %v485 = vmul.f32 %v483, 1.442695
    %v486 = vpow.pop %v485
    %v487 = vmul.f32 %v484, 1.442695
    %v488 = vpow.pop %v487
    %v489 = vsel %vm274, %v486, 0.0
    %490 = vadd.xlane.f32.xlu0 %v489
    %v491 = vpop.xlane.xlu0 %490
    %v492 = vsel %vm274, %v488, 0.0
    %493 = vadd.xlane.f32.xlu0 %v492
    %v494 = vpop.xlane.xlu0 %493
    %v495 = vrcp.pop %v491
    %v496 = vmul.f32 %v486, %v495
    %v497 = vrcp.pop %v494
    %v498 = vmul.f32 %v488, %v497
    %499 = vrot.lane.b32.xlu0 %v172, 56
    %v500 = vpop.permute.xlu0 %499
    %501 = vrot.lane.b32.xlu0 %v177, 56
    %v502 = vpop.permute.xlu0 %501
    %v506 = vsel %vm274, %v496, 0
    %v509 = vsel %vm274, %v498, 0
    %511 = vmatprep.subr.mxu0 0.0
    %512 = vmatpush1.msra.mxu0 0.0
    %513 = vmatprep.subr.mxu0 0.0
    %514 = vmatpush1.msra.mxu0 0.0
    %515 = vmatprep.subr.mxu0 0.0
    %516 = vmatpush1.msra.mxu0 0.0
    %517 = vmatprep.subr.mxu0 0.0
    %518 = vmatpush1.msra.mxu0 0.0
    %519 = vmatprep.subr.mxu0 0.0
    %520 = vmatpush1.msra.mxu0 0.0
    %521 = vmatprep.subr.mxu0 0.0
    %522 = vmatpush1.msra.mxu0 0.0
    %523 = vmatprep.subr.mxu0 0.0
    %524 = vmatpush1.msra.mxu0 0.0
    %525 = vmatprep.subr.mxu0 0.0
    %526 = vmatpush1.msra.mxu0 0.0
    %527 = vmatprep.subr.mxu0 0.0
    %528 = vmatpush1.msra.mxu0 0.0
    %529 = vmatprep.subr.mxu0 0.0
    %530 = vmatpush1.msra.mxu0 0.0
    %531 = vmatprep.subr.mxu0 0.0
    %532 = vmatpush1.msra.mxu0 0.0
    %533 = vmatprep.subr.mxu0 0.0
    %534 = vmatpush1.msra.mxu0 0.0
    %535 = vmatprep.subr.mxu0 0.0
    %536 = vmatpush1.msra.mxu0 0.0
    %537 = vmatprep.subr.mxu0 0.0
    %538 = vmatpush1.msra.mxu0 0.0
    %539 = vmatprep.subr.mxu0 0.0
    %540 = vmatpush1.msra.mxu0 %v502
    %541 = vmatprep.subr.mxu0 0.0
    %542 = vmatpush1.msra.mxu0 %v500
    %543 = vmatprep.subr.mxu0 0.0
    %544 = vmatpush2.msra.mxu0 0.0
    %545 = vmatprep.subr.mxu0 0.0
    %546 = vmatpush2.msra.mxu0 0.0
    %547 = vmatprep.subr.mxu0 0.0
    %548 = vmatpush2.msra.mxu0 0.0
    %549 = vmatprep.subr.mxu0 0.0
    %550 = vmatpush2.msra.mxu0 0.0
    %551 = vmatprep.subr.mxu0 0.0
    %552 = vmatpush2.msra.mxu0 0.0
    %553 = vmatprep.subr.mxu0 0.0
    %554 = vmatpush2.msra.mxu0 0.0
    %555 = vmatprep.subr.mxu0 0.0
    %556 = vmatpush2.msra.mxu0 0.0
    %557 = vmatprep.subr.mxu0 0.0
    %558 = vmatpush2.msra.mxu0 0.0
    %559 = vmatprep.subr.mxu0 0.0
    %560 = vmatpush2.msra.mxu0 0.0
    %561 = vmatprep.subr.mxu0 0.0
    %562 = vmatpush2.msra.mxu0 0.0
    %563 = vmatprep.subr.mxu0 0.0
    %564 = vmatpush2.msra.mxu0 0.0
    %565 = vmatprep.subr.mxu0 0.0
    %566 = vmatpush2.msra.mxu0 0.0
    %567 = vmatprep.subr.mxu0 0.0
    %568 = vmatpush2.msra.mxu0 0.0
    %569 = vmatprep.subr.mxu0 0.0
    %570 = vmatpush2.msra.mxu0 0.0
    %571 = vmatprep.subr.mxu0 0.0
    %572 = vmatpush2.msra.mxu0 0.0
    %573 = vmatprep.subr.mxu0 0.0
    %574 = vmatpush2.msra.mxu0 0.0
    %575 = vmatprep.mubr.f32.mxu0 0.0
    %576 = vmatmul.mubr.f32.gmra.mxu0 %v506
    %v577 = vpop.f32.mrf.mxu0
    %v578 = vadd.f32 0.0, %v577
    %v579 = vpop.f32.mrf.mxu0
    %580 = vmatprep.mubr.f32.mxu0 0.0
    %581 = vmatmul.mubr.f32.gmra.mxu0 %v509
    %v582 = vpop.f32.mrf.mxu0
    %v583 = vadd.f32 0.0, %v582
    %v584 = vpop.f32.mrf.mxu0
    %585 = vdwg.mxu0
    %588 = vrot.lane.b32.xlu0 %v578, 8
    %v589 = vpop.permute.xlu0 %588
    %590 = vrot.lane.b32.xlu0 %v583, 8
    %v591 = vpop.permute.xlu0 %590
    %vm594 = vcmask 130112
    %595 = vst.msk [vmem:[#allocation2] sm:$0xff] %vm594, %v589
    %596 = vst.msk [vmem:[#allocation2 + $0x8] sm:$0xff] %vm594, %v591
    %597 = vrot.lane.b32.xlu0 %v180, 112
    %v598 = vpop.permute.xlu0 %597
    %599 = vrot.lane.b32.xlu0 %v181, 112
    %v600 = vpop.permute.xlu0 %599
    %601 = vrot.lane.b32.xlu0 %v172, 80
    %v602 = vpop.permute.xlu0 %601
    %603 = vrot.lane.b32.xlu0 %v177, 80
    %v604 = vpop.permute.xlu0 %603
    %v605 = vsel %vm188, %v598, 0
    %v607 = vsel %vm188, %v600, 0
    %v609 = vsel %vm188, %v602, 0
    %v611 = vsel %vm188, %v604, 0
    %613 = vmatprep.subr.mxu0 0.0
    %614 = vmatpush1.xpose.msra.mxu0 0.0
    %615 = vmatprep.subr.mxu0 0.0
    %616 = vmatpush1.xpose.msra.mxu0 0.0
    %617 = vmatprep.subr.mxu0 0.0
    %618 = vmatpush1.xpose.msra.mxu0 0.0
    %619 = vmatprep.subr.mxu0 0.0
    %620 = vmatpush1.xpose.msra.mxu0 0.0
    %621 = vmatprep.subr.mxu0 0.0
    %622 = vmatpush1.xpose.msra.mxu0 0.0
    %623 = vmatprep.subr.mxu0 0.0
    %624 = vmatpush1.xpose.msra.mxu0 0.0
    %625 = vmatprep.subr.mxu0 0.0
    %626 = vmatpush1.xpose.msra.mxu0 0.0
    %627 = vmatprep.subr.mxu0 0.0
    %628 = vmatpush1.xpose.msra.mxu0 0.0
    %629 = vmatprep.subr.mxu0 0.0
    %630 = vmatpush1.xpose.msra.mxu0 0.0
    %631 = vmatprep.subr.mxu0 0.0
    %632 = vmatpush1.xpose.msra.mxu0 0.0
    %633 = vmatprep.subr.mxu0 0.0
    %634 = vmatpush1.xpose.msra.mxu0 0.0
    %635 = vmatprep.subr.mxu0 0.0
    %636 = vmatpush1.xpose.msra.mxu0 0.0
    %637 = vmatprep.subr.mxu0 0.0
    %638 = vmatpush1.xpose.msra.mxu0 0.0
    %639 = vmatprep.subr.mxu0 0.0
    %640 = vmatpush1.xpose.msra.mxu0 0.0
    %641 = vmatprep.subr.mxu0 0.0
    %642 = vmatpush1.xpose.msra.mxu0 %v611
    %643 = vmatprep.subr.mxu0 0.0
    %644 = vmatpush1.xpose.msra.mxu0 %v609
    %645 = vmatprep.subr.mxu0 0.0
    %646 = vmatpush2.xpose.msra.mxu0 0.0
    %647 = vmatprep.subr.mxu0 0.0
    %648 = vmatpush2.xpose.msra.mxu0 0.0
    %649 = vmatprep.subr.mxu0 0.0
    %650 = vmatpush2.xpose.msra.mxu0 0.0
    %651 = vmatprep.subr.mxu0 0.0
    %652 = vmatpush2.xpose.msra.mxu0 0.0
    %653 = vmatprep.subr.mxu0 0.0
    %654 = vmatpush2.xpose.msra.mxu0 0.0
    %655 = vmatprep.subr.mxu0 0.0
    %656 = vmatpush2.xpose.msra.mxu0 0.0
    %657 = vmatprep.subr.mxu0 0.0
    %658 = vmatpush2.xpose.msra.mxu0 0.0
    %659 = vmatprep.subr.mxu0 0.0
    %660 = vmatpush2.xpose.msra.mxu0 0.0
    %661 = vmatprep.subr.mxu0 0.0
    %662 = vmatpush2.xpose.msra.mxu0 0.0
    %663 = vmatprep.subr.mxu0 0.0
    %664 = vmatpush2.xpose.msra.mxu0 0.0
    %665 = vmatprep.subr.mxu0 0.0
    %666 = vmatpush2.xpose.msra.mxu0 0.0
    %667 = vmatprep.subr.mxu0 0.0
    %668 = vmatpush2.xpose.msra.mxu0 0.0
    %669 = vmatprep.subr.mxu0 0.0
    %670 = vmatpush2.xpose.msra.mxu0 0.0
    %671 = vmatprep.subr.mxu0 0.0
    %672 = vmatpush2.xpose.msra.mxu0 0.0
    %673 = vmatprep.subr.mxu0 0.0
    %674 = vmatpush2.xpose.msra.mxu0 0.0
    %675 = vmatprep.subr.mxu0 0.0
    %676 = vmatpush2.xpose.msra.mxu0 0.0
    %677 = vmatprep.mubr.f32.mxu0 0.0
    %678 = vmatmul.mubr.f32.gmra.mxu0 %v605
    %v679 = vpop.f32.mrf.mxu0
    %v680 = vadd.f32 %v87, %v679
    %v681 = vpop.f32.mrf.mxu0
    %682 = vmatprep.mubr.f32.mxu0 0.0
    %683 = vmatmul.mubr.f32.gmra.mxu0 %v607
    %v684 = vpop.f32.mrf.mxu0
    %v685 = vadd.f32 %v88, %v684
    %v686 = vpop.f32.mrf.mxu0
    %687 = vdwg.mxu0
    %v688 = vsel %vm274, %v680, -inf
    %689 = vmax.xlane.f32.xlu0 %v688
    %v690 = vpop.xlane.xlu0 %689
    %v691 = vsel %vm274, %v685, -inf
    %692 = vmax.xlane.f32.xlu0 %v691
    %v693 = vpop.xlane.xlu0 %692
    %v694 = vsub.f32 %v680, %v690
    %v695 = vsub.f32 %v685, %v693
    %v696 = vmul.f32 %v694, 1.442695
    %v697 = vpow.pop %v696
    %v698 = vmul.f32 %v695, 1.442695
    %v699 = vpow.pop %v698
    %v700 = vsel %vm274, %v697, 0.0
    %701 = vadd.xlane.f32.xlu0 %v700
    %v702 = vpop.xlane.xlu0 %701
    %v703 = vsel %vm274, %v699, 0.0
    %704 = vadd.xlane.f32.xlu0 %v703
    %v705 = vpop.xlane.xlu0 %704
    %v706 = vrcp.pop %v702
    %v707 = vmul.f32 %v697, %v706
    %v708 = vrcp.pop %v705
    %v709 = vmul.f32 %v699, %v708
    %710 = vrot.lane.b32.xlu0 %v172, 48
    %v711 = vpop.permute.xlu0 %710
    %712 = vrot.lane.b32.xlu0 %v177, 48
    %v713 = vpop.permute.xlu0 %712
    %v717 = vsel %vm274, %v707, 0
    %v720 = vsel %vm274, %v709, 0
    %722 = vmatprep.subr.mxu0 0.0
    %723 = vmatpush1.msra.mxu0 0.0
    %724 = vmatprep.subr.mxu0 0.0
    %725 = vmatpush1.msra.mxu0 0.0
    %726 = vmatprep.subr.mxu0 0.0
    %727 = vmatpush1.msra.mxu0 0.0
    %728 = vmatprep.subr.mxu0 0.0
    %729 = vmatpush1.msra.mxu0 0.0
    %730 = vmatprep.subr.mxu0 0.0
    %731 = vmatpush1.msra.mxu0 0.0
    %732 = vmatprep.subr.mxu0 0.0
    %733 = vmatpush1.msra.mxu0 0.0
    %734 = vmatprep.subr.mxu0 0.0
    %735 = vmatpush1.msra.mxu0 0.0
    %736 = vmatprep.subr.mxu0 0.0
    %737 = vmatpush1.msra.mxu0 0.0
    %738 = vmatprep.subr.mxu0 0.0
    %739 = vmatpush1.msra.mxu0 0.0
    %740 = vmatprep.subr.mxu0 0.0
    %741 = vmatpush1.msra.mxu0 0.0
    %742 = vmatprep.subr.mxu0 0.0
    %743 = vmatpush1.msra.mxu0 0.0
    %744 = vmatprep.subr.mxu0 0.0
    %745 = vmatpush1.msra.mxu0 0.0
    %746 = vmatprep.subr.mxu0 0.0
    %747 = vmatpush1.msra.mxu0 0.0
    %748 = vmatprep.subr.mxu0 0.0
    %749 = vmatpush1.msra.mxu0 0.0
    %750 = vmatprep.subr.mxu0 0.0
    %751 = vmatpush1.msra.mxu0 %v713
    %752 = vmatprep.subr.mxu0 0.0
    %753 = vmatpush1.msra.mxu0 %v711
    %754 = vmatprep.subr.mxu0 0.0
    %755 = vmatpush2.msra.mxu0 0.0
    %756 = vmatprep.subr.mxu0 0.0
    %757 = vmatpush2.msra.mxu0 0.0
    %758 = vmatprep.subr.mxu0 0.0
    %759 = vmatpush2.msra.mxu0 0.0
    %760 = vmatprep.subr.mxu0 0.0
    %761 = vmatpush2.msra.mxu0 0.0
    %762 = vmatprep.subr.mxu0 0.0
    %763 = vmatpush2.msra.mxu0 0.0
    %764 = vmatprep.subr.mxu0 0.0
    %765 = vmatpush2.msra.mxu0 0.0
    %766 = vmatprep.subr.mxu0 0.0
    %767 = vmatpush2.msra.mxu0 0.0
    %768 = vmatprep.subr.mxu0 0.0
    %769 = vmatpush2.msra.mxu0 0.0
    %770 = vmatprep.subr.mxu0 0.0
    %771 = vmatpush2.msra.mxu0 0.0
    %772 = vmatprep.subr.mxu0 0.0
    %773 = vmatpush2.msra.mxu0 0.0
    %774 = vmatprep.subr.mxu0 0.0
    %775 = vmatpush2.msra.mxu0 0.0
    %776 = vmatprep.subr.mxu0 0.0
    %777 = vmatpush2.msra.mxu0 0.0
    %778 = vmatprep.subr.mxu0 0.0
    %779 = vmatpush2.msra.mxu0 0.0
    %780 = vmatprep.subr.mxu0 0.0
    %781 = vmatpush2.msra.mxu0 0.0
    %782 = vmatprep.subr.mxu0 0.0
    %783 = vmatpush2.msra.mxu0 0.0
    %784 = vmatprep.subr.mxu0 0.0
    %785 = vmatpush2.msra.mxu0 0.0
    %786 = vmatprep.mubr.f32.mxu0 0.0
    %787 = vmatmul.mubr.f32.gmra.mxu0 %v717
    %v788 = vpop.f32.mrf.mxu0
    %v789 = vadd.f32 0.0, %v788
    %v790 = vpop.f32.mrf.mxu0
    %791 = vmatprep.mubr.f32.mxu0 0.0
    %792 = vmatmul.mubr.f32.gmra.mxu0 %v720
    %v793 = vpop.f32.mrf.mxu0
    %v794 = vadd.f32 0.0, %v793
    %v795 = vpop.f32.mrf.mxu0
    %796 = vdwg.mxu0
    %799 = vrot.lane.b32.xlu0 %v789, 16
    %v800 = vpop.permute.xlu0 %799
    %801 = vrot.lane.b32.xlu0 %v794, 16
    %v802 = vpop.permute.xlu0 %801
    %vm805 = vcmask 195712
    %806 = vst.msk [vmem:[#allocation2] sm:$0xff] %vm805, %v800
    %807 = vst.msk [vmem:[#allocation2 + $0x8] sm:$0xff] %vm805, %v802
    %808 = vrot.lane.b32.xlu0 %v180, 104
    %v809 = vpop.permute.xlu0 %808
    %810 = vrot.lane.b32.xlu0 %v181, 104
    %v811 = vpop.permute.xlu0 %810
    %812 = vrot.lane.b32.xlu0 %v172, 72
    %v813 = vpop.permute.xlu0 %812
    %814 = vrot.lane.b32.xlu0 %v177, 72
    %v815 = vpop.permute.xlu0 %814
    %v816 = vsel %vm188, %v809, 0
    %v818 = vsel %vm188, %v811, 0
    %v820 = vsel %vm188, %v813, 0
    %v822 = vsel %vm188, %v815, 0
    %824 = vmatprep.subr.mxu0 0.0
    %825 = vmatpush1.xpose.msra.mxu0 0.0
    %826 = vmatprep.subr.mxu0 0.0
    %827 = vmatpush1.xpose.msra.mxu0 0.0
    %828 = vmatprep.subr.mxu0 0.0
    %829 = vmatpush1.xpose.msra.mxu0 0.0
    %830 = vmatprep.subr.mxu0 0.0
    %831 = vmatpush1.xpose.msra.mxu0 0.0
    %832 = vmatprep.subr.mxu0 0.0
    %833 = vmatpush1.xpose.msra.mxu0 0.0
    %834 = vmatprep.subr.mxu0 0.0
    %835 = vmatpush1.xpose.msra.mxu0 0.0
    %836 = vmatprep.subr.mxu0 0.0
    %837 = vmatpush1.xpose.msra.mxu0 0.0
    %838 = vmatprep.subr.mxu0 0.0
    %839 = vmatpush1.xpose.msra.mxu0 0.0
    %840 = vmatprep.subr.mxu0 0.0
    %841 = vmatpush1.xpose.msra.mxu0 0.0
    %842 = vmatprep.subr.mxu0 0.0
    %843 = vmatpush1.xpose.msra.mxu0 0.0
    %844 = vmatprep.subr.mxu0 0.0
    %845 = vmatpush1.xpose.msra.mxu0 0.0
    %846 = vmatprep.subr.mxu0 0.0
    %847 = vmatpush1.xpose.msra.mxu0 0.0
    %848 = vmatprep.subr.mxu0 0.0
    %849 = vmatpush1.xpose.msra.mxu0 0.0
    %850 = vmatprep.subr.mxu0 0.0
    %851 = vmatpush1.xpose.msra.mxu0 0.0
    %852 = vmatprep.subr.mxu0 0.0
    %853 = vmatpush1.xpose.msra.mxu0 %v822
    %854 = vmatprep.subr.mxu0 0.0
    %855 = vmatpush1.xpose.msra.mxu0 %v820
    %856 = vmatprep.subr.mxu0 0.0
    %857 = vmatpush2.xpose.msra.mxu0 0.0
    %858 = vmatprep.subr.mxu0 0.0
    %859 = vmatpush2.xpose.msra.mxu0 0.0
    %860 = vmatprep.subr.mxu0 0.0
    %861 = vmatpush2.xpose.msra.mxu0 0.0
    %862 = vmatprep.subr.mxu0 0.0
    %863 = vmatpush2.xpose.msra.mxu0 0.0
    %864 = vmatprep.subr.mxu0 0.0
    %865 = vmatpush2.xpose.msra.mxu0 0.0
    %866 = vmatprep.subr.mxu0 0.0
    %867 = vmatpush2.xpose.msra.mxu0 0.0
    %868 = vmatprep.subr.mxu0 0.0
    %869 = vmatpush2.xpose.msra.mxu0 0.0
    %870 = vmatprep.subr.mxu0 0.0
    %871 = vmatpush2.xpose.msra.mxu0 0.0
    %872 = vmatprep.subr.mxu0 0.0
    %873 = vmatpush2.xpose.msra.mxu0 0.0
    %874 = vmatprep.subr.mxu0 0.0
    %875 = vmatpush2.xpose.msra.mxu0 0.0
    %876 = vmatprep.subr.mxu0 0.0
    %877 = vmatpush2.xpose.msra.mxu0 0.0
    %878 = vmatprep.subr.mxu0 0.0
    %879 = vmatpush2.xpose.msra.mxu0 0.0
    %880 = vmatprep.subr.mxu0 0.0
    %881 = vmatpush2.xpose.msra.mxu0 0.0
    %882 = vmatprep.subr.mxu0 0.0
    %883 = vmatpush2.xpose.msra.mxu0 0.0
    %884 = vmatprep.subr.mxu0 0.0
    %885 = vmatpush2.xpose.msra.mxu0 0.0
    %886 = vmatprep.subr.mxu0 0.0
    %887 = vmatpush2.xpose.msra.mxu0 0.0
    %888 = vmatprep.mubr.f32.mxu0 0.0
    %889 = vmatmul.mubr.f32.gmra.mxu0 %v816
    %v890 = vpop.f32.mrf.mxu0
    %v891 = vadd.f32 %v87, %v890
    %v892 = vpop.f32.mrf.mxu0
    %893 = vmatprep.mubr.f32.mxu0 0.0
    %894 = vmatmul.mubr.f32.gmra.mxu0 %v818
    %v895 = vpop.f32.mrf.mxu0
    %v896 = vadd.f32 %v88, %v895
    %v897 = vpop.f32.mrf.mxu0
    %898 = vdwg.mxu0
    %v899 = vsel %vm274, %v891, -inf
    %900 = vmax.xlane.f32.xlu0 %v899
    %v901 = vpop.xlane.xlu0 %900
    %v902 = vsel %vm274, %v896, -inf
    %903 = vmax.xlane.f32.xlu0 %v902
    %v904 = vpop.xlane.xlu0 %903
    %v905 = vsub.f32 %v891, %v901
    %v906 = vsub.f32 %v896, %v904
    %v907 = vmul.f32 %v905, 1.442695
    %v908 = vpow.pop %v907
    %v909 = vmul.f32 %v906, 1.442695
    %v910 = vpow.pop %v909
    %v911 = vsel %vm274, %v908, 0.0
    %912 = vadd.xlane.f32.xlu0 %v911
    %v913 = vpop.xlane.xlu0 %912
    %v914 = vsel %vm274, %v910, 0.0
    %915 = vadd.xlane.f32.xlu0 %v914
    %v916 = vpop.xlane.xlu0 %915
    %v917 = vrcp.pop %v913
    %v918 = vmul.f32 %v908, %v917
    %v919 = vrcp.pop %v916
    %v920 = vmul.f32 %v910, %v919
    %921 = vrot.lane.b32.xlu0 %v172, 40
    %v922 = vpop.permute.xlu0 %921
    %923 = vrot.lane.b32.xlu0 %v177, 40
    %v924 = vpop.permute.xlu0 %923
    %v928 = vsel %vm274, %v918, 0
    %v931 = vsel %vm274, %v920, 0
    %933 = vmatprep.subr.mxu0 0.0
    %934 = vmatpush1.msra.mxu0 0.0
    %935 = vmatprep.subr.mxu0 0.0
    %936 = vmatpush1.msra.mxu0 0.0
    %937 = vmatprep.subr.mxu0 0.0
    %938 = vmatpush1.msra.mxu0 0.0
    %939 = vmatprep.subr.mxu0 0.0
    %940 = vmatpush1.msra.mxu0 0.0
    %941 = vmatprep.subr.mxu0 0.0
    %942 = vmatpush1.msra.mxu0 0.0
    %943 = vmatprep.subr.mxu0 0.0
    %944 = vmatpush1.msra.mxu0 0.0
    %945 = vmatprep.subr.mxu0 0.0
    %946 = vmatpush1.msra.mxu0 0.0
    %947 = vmatprep.subr.mxu0 0.0
    %948 = vmatpush1.msra.mxu0 0.0
    %949 = vmatprep.subr.mxu0 0.0
    %950 = vmatpush1.msra.mxu0 0.0
    %951 = vmatprep.subr.mxu0 0.0
    %952 = vmatpush1.msra.mxu0 0.0
    %953 = vmatprep.subr.mxu0 0.0
    %954 = vmatpush1.msra.mxu0 0.0
    %955 = vmatprep.subr.mxu0 0.0
    %956 = vmatpush1.msra.mxu0 0.0
    %957 = vmatprep.subr.mxu0 0.0
    %958 = vmatpush1.msra.mxu0 0.0
    %959 = vmatprep.subr.mxu0 0.0
    %960 = vmatpush1.msra.mxu0 0.0
    %961 = vmatprep.subr.mxu0 0.0
    %962 = vmatpush1.msra.mxu0 %v924
    %963 = vmatprep.subr.mxu0 0.0
    %964 = vmatpush1.msra.mxu0 %v922
    %965 = vmatprep.subr.mxu0 0.0
    %966 = vmatpush2.msra.mxu0 0.0
    %967 = vmatprep.subr.mxu0 0.0
    %968 = vmatpush2.msra.mxu0 0.0
    %969 = vmatprep.subr.mxu0 0.0
    %970 = vmatpush2.msra.mxu0 0.0
    %971 = vmatprep.subr.mxu0 0.0
    %972 = vmatpush2.msra.mxu0 0.0
    %973 = vmatprep.subr.mxu0 0.0
    %974 = vmatpush2.msra.mxu0 0.0
    %975 = vmatprep.subr.mxu0 0.0
    %976 = vmatpush2.msra.mxu0 0.0
    %977 = vmatprep.subr.mxu0 0.0
    %978 = vmatpush2.msra.mxu0 0.0
    %979 = vmatprep.subr.mxu0 0.0
    %980 = vmatpush2.msra.mxu0 0.0
    %981 = vmatprep.subr.mxu0 0.0
    %982 = vmatpush2.msra.mxu0 0.0
    %983 = vmatprep.subr.mxu0 0.0
    %984 = vmatpush2.msra.mxu0 0.0
    %985 = vmatprep.subr.mxu0 0.0
    %986 = vmatpush2.msra.mxu0 0.0
    %987 = vmatprep.subr.mxu0 0.0
    %988 = vmatpush2.msra.mxu0 0.0
    %989 = vmatprep.subr.mxu0 0.0
    %990 = vmatpush2.msra.mxu0 0.0
    %991 = vmatprep.subr.mxu0 0.0
    %992 = vmatpush2.msra.mxu0 0.0
    %993 = vmatprep.subr.mxu0 0.0
    %994 = vmatpush2.msra.mxu0 0.0
    %995 = vmatprep.subr.mxu0 0.0
    %996 = vmatpush2.msra.mxu0 0.0
    %997 = vmatprep.mubr.f32.mxu0 0.0
    %998 = vmatmul.mubr.f32.gmra.mxu0 %v928
    %v999 = vpop.f32.mrf.mxu0
    %v1000 = vadd.f32 0.0, %v999
    %v1001 = vpop.f32.mrf.mxu0
    %1002 = vmatprep.mubr.f32.mxu0 0.0
    %1003 = vmatmul.mubr.f32.gmra.mxu0 %v931
    %v1004 = vpop.f32.mrf.mxu0
    %v1005 = vadd.f32 0.0, %v1004
    %v1006 = vpop.f32.mrf.mxu0
    %1007 = vdwg.mxu0
    %1010 = vrot.lane.b32.xlu0 %v1000, 24
    %v1011 = vpop.permute.xlu0 %1010
    %1012 = vrot.lane.b32.xlu0 %v1005, 24
    %v1013 = vpop.permute.xlu0 %1012
    %vm1016 = vcmask 261312
    %1017 = vst.msk [vmem:[#allocation2] sm:$0xff] %vm1016, %v1011
    %1018 = vst.msk [vmem:[#allocation2 + $0x8] sm:$0xff] %vm1016, %v1013
    %v1019 = vld [vmem:[#allocation2] sm:$0xff]
    %v1020 = vld [vmem:[#allocation2 + $0x8] sm:$0xff]
    %v1021 = vld [vmem:[#allocation8 + $0x20] sm:$0xff]
    %v1022 = vld [vmem:[#allocation8 + $0x28] sm:$0xff]
    %v1023 = vld [vmem:[#allocation8 + $0x30] sm:$0xff]
    %v1024 = vld [vmem:[#allocation8 + $0x38] sm:$0xff]
    %v1025 = vld [vmem:[#allocation9 + $0x1] sm:$0x1]
    %v1026 = vlaneseq
    %v1027 = vshrl.u32 %v1026, 7
    %v1028 = vsub.s32 0, %v1027
    %v1029 = vrot.slane %v1025, %v1028
    %v1031 = vsel %vm98, %v1019, 0
    %v1034 = vsel %vm98, %v1020, 0
    %1036 = vmatprep.subr.mxu0 0.0
    %1037 = vmatpush1.msra.mxu0 0.0
    %1038 = vmatprep.subr.mxu0 0.0
    %1039 = vmatpush1.msra.mxu0 0.0
    %1040 = vmatprep.subr.mxu0 0.0
    %1041 = vmatpush1.msra.mxu0 0.0
    %1042 = vmatprep.subr.mxu0 0.0
    %1043 = vmatpush1.msra.mxu0 0.0
    %1044 = vmatprep.subr.mxu0 0.0
    %1045 = vmatpush1.msra.mxu0 0.0
    %1046 = vmatprep.subr.mxu0 0.0
    %1047 = vmatpush1.msra.mxu0 0.0
    %1048 = vmatprep.subr.mxu0 0.0
    %1049 = vmatpush1.msra.mxu0 0.0
    %1050 = vmatprep.subr.mxu0 0.0
    %1051 = vmatpush1.msra.mxu0 0.0
    %1052 = vmatprep.subr.mxu0 0.0
    %1053 = vmatpush1.msra.mxu0 0.0
    %1054 = vmatprep.subr.mxu0 0.0
    %1055 = vmatpush1.msra.mxu0 0.0
    %1056 = vmatprep.subr.mxu0 0.0
    %1057 = vmatpush1.msra.mxu0 0.0
    %1058 = vmatprep.subr.mxu0 0.0
    %1059 = vmatpush1.msra.mxu0 0.0
    %1060 = vmatprep.subr.mxu0 0.0
    %1061 = vmatpush1.msra.mxu0 %v1024
    %1062 = vmatprep.subr.mxu0 0.0
    %1063 = vmatpush1.msra.mxu0 %v1023
    %1064 = vmatprep.subr.mxu0 0.0
    %1065 = vmatpush1.msra.mxu0 %v1022
    %1066 = vmatprep.subr.mxu0 0.0
    %1067 = vmatpush1.msra.mxu0 %v1021
    %1068 = vmatprep.subr.mxu0 0.0
    %1069 = vmatpush2.msra.mxu0 0.0
    %1070 = vmatprep.subr.mxu0 0.0
    %1071 = vmatpush2.msra.mxu0 0.0
    %1072 = vmatprep.subr.mxu0 0.0
    %1073 = vmatpush2.msra.mxu0 0.0
    %1074 = vmatprep.subr.mxu0 0.0
    %1075 = vmatpush2.msra.mxu0 0.0
    %1076 = vmatprep.subr.mxu0 0.0
    %1077 = vmatpush2.msra.mxu0 0.0
    %1078 = vmatprep.subr.mxu0 0.0
    %1079 = vmatpush2.msra.mxu0 0.0
    %1080 = vmatprep.subr.mxu0 0.0
    %1081 = vmatpush2.msra.mxu0 0.0
    %1082 = vmatprep.subr.mxu0 0.0
    %1083 = vmatpush2.msra.mxu0 0.0
    %1084 = vmatprep.subr.mxu0 0.0
    %1085 = vmatpush2.msra.mxu0 0.0
    %1086 = vmatprep.subr.mxu0 0.0
    %1087 = vmatpush2.msra.mxu0 0.0
    %1088 = vmatprep.subr.mxu0 0.0
    %1089 = vmatpush2.msra.mxu0 0.0
    %1090 = vmatprep.subr.mxu0 0.0
    %1091 = vmatpush2.msra.mxu0 0.0
    %1092 = vmatprep.subr.mxu0 0.0
    %1093 = vmatpush2.msra.mxu0 0.0
    %1094 = vmatprep.subr.mxu0 0.0
    %1095 = vmatpush2.msra.mxu0 0.0
    %1096 = vmatprep.subr.mxu0 0.0
    %1097 = vmatpush2.msra.mxu0 0.0
    %1098 = vmatprep.subr.mxu0 0.0
    %1099 = vmatpush2.msra.mxu0 0.0
    %1100 = vmatprep.mubr.f32.mxu0 0.0
    %1101 = vmatmul.mubr.f32.gmra.mxu0 %v1031
    %v1102 = vpop.f32.mrf.mxu0
    %v1103 = vadd.f32 %v1029, %v1102
    %v1104 = vpop.f32.mrf.mxu0
    %1105 = vmatprep.mubr.f32.mxu0 0.0
    %1106 = vmatmul.mubr.f32.gmra.mxu0 %v1034
    %v1107 = vpop.f32.mrf.mxu0
    %v1108 = vadd.f32 %v1029, %v1107
    %v1109 = vpop.f32.mrf.mxu0
    %1110 = vdwg.mxu0
    %v1111 = vadd.f32 %v73, %v1103
    %v1112 = vadd.f32 %v74, %v1108
    %v1113 = vld [vmem:[#allocation9 + $0x7] sm:$0x1]
    %v1114 = vld [vmem:[#allocation9 + $0x8] sm:$0x1]
    %v1115 = vsel %vm98, %v1111, 0.0
    %1116 = vadd.xlane.f32.xlu0 %v1115
    %v1117 = vpop.xlane.xlu0 %1116
    %v1118 = vsel %vm98, %v1112, 0.0
    %1119 = vadd.xlane.f32.xlu0 %v1118
    %v1120 = vpop.xlane.xlu0 %1119
    %v1121 = vrcp.pop 32.0
    %v1122 = vmul.f32 %v1117, %v1121
    %v1123 = vmul.f32 %v1120, %v1121
    %v1124 = vsub.f32 %v1111, %v1122
    %v1125 = vsub.f32 %v1112, %v1123
    %v1126 = vmul.f32 %v1124, %v1124
    %v1127 = vmul.f32 %v1125, %v1125
    %v1128 = vsel %vm98, %v1126, 0.0
    %1129 = vadd.xlane.f32.xlu0 %v1128
    %v1130 = vpop.xlane.xlu0 %1129
    %v1131 = vsel %vm98, %v1127, 0.0
    %1132 = vadd.xlane.f32.xlu0 %v1131
    %v1133 = vpop.xlane.xlu0 %1132
    %v1134 = vmul.f32 %v1130, %v1121
    %v1135 = vmul.f32 %v1133, %v1121
    %v1136 = vadd.f32 %v1134, 1e-05
    %v1137 = vadd.f32 %v1135, 1e-05
    %v1138 = vrsqrt.pop %v1136
    %v1139 = vrsqrt.pop %v1137
    %v1140 = vmul.f32 %v1124, %v1138
    %v1141 = vmul.f32 %v1125, %v1139
    %v1142 = vlaneseq
    %v1143 = vshrl.u32 %v1142, 7
    %v1144 = vsub.s32 0, %v1143
    %v1145 = vrot.slane %v1113, %v1144
    %v1146 = vmul.f32 %v1140, %v1145
    %v1147 = vmul.f32 %v1141, %v1145
    %v1148 = vlaneseq
    %v1149 = vshrl.u32 %v1148, 7
    %v1150 = vsub.s32 0, %v1149
    %v1151 = vrot.slane %v1114, %v1150
    %v1152 = vadd.f32 %v1146, %v1151
    %v1153 = vadd.f32 %v1147, %v1151
    %v1154 = vld [vmem:[#allocation8 + $0x40] sm:$0xff]
    %v1155 = vld [vmem:[#allocation8 + $0x48] sm:$0xff]
    %v1156 = vld [vmem:[#allocation8 + $0x50] sm:$0xff]
    %v1157 = vld [vmem:[#allocation8 + $0x58] sm:$0xff]
    %v1158 = vld [vmem:[#allocation9 + $0x2] sm:$0x1]
    %v1159 = vlaneseq
    %v1160 = vshrl.u32 %v1159, 7
    %v1161 = vsub.s32 0, %v1160
    %v1162 = vrot.slane %v1158, %v1161
    %v1164 = vsel %vm98, %v1152, 0
    %v1167 = vsel %vm98, %v1153, 0
    %1169 = vmatprep.subr.mxu0 0.0
    %1170 = vmatpush1.msra.mxu0 0.0
    %1171 = vmatprep.subr.mxu0 0.0
    %1172 = vmatpush1.msra.mxu0 0.0
    %1173 = vmatprep.subr.mxu0 0.0
    %1174 = vmatpush1.msra.mxu0 0.0
    %1175 = vmatprep.subr.mxu0 0.0
    %1176 = vmatpush1.msra.mxu0 0.0
    %1177 = vmatprep.subr.mxu0 0.0
    %1178 = vmatpush1.msra.mxu0 0.0
    %1179 = vmatprep.subr.mxu0 0.0
    %1180 = vmatpush1.msra.mxu0 0.0
    %1181 = vmatprep.subr.mxu0 0.0
    %1182 = vmatpush1.msra.mxu0 0.0
    %1183 = vmatprep.subr.mxu0 0.0
    %1184 = vmatpush1.msra.mxu0 0.0
    %1185 = vmatprep.subr.mxu0 0.0
    %1186 = vmatpush1.msra.mxu0 0.0
    %1187 = vmatprep.subr.mxu0 0.0
    %1188 = vmatpush1.msra.mxu0 0.0
    %1189 = vmatprep.subr.mxu0 0.0
    %1190 = vmatpush1.msra.mxu0 0.0
    %1191 = vmatprep.subr.mxu0 0.0
    %1192 = vmatpush1.msra.mxu0 0.0
    %1193 = vmatprep.subr.mxu0 0.0
    %1194 = vmatpush1.msra.mxu0 %v1157
    %1195 = vmatprep.subr.mxu0 0.0
    %1196 = vmatpush1.msra.mxu0 %v1156
    %1197 = vmatprep.subr.mxu0 0.0
    %1198 = vmatpush1.msra.mxu0 %v1155
    %1199 = vmatprep.subr.mxu0 0.0
    %1200 = vmatpush1.msra.mxu0 %v1154
    %1201 = vmatprep.subr.mxu0 0.0
    %1202 = vmatpush2.msra.mxu0 0.0
    %1203 = vmatprep.subr.mxu0 0.0
    %1204 = vmatpush2.msra.mxu0 0.0
    %1205 = vmatprep.subr.mxu0 0.0
    %1206 = vmatpush2.msra.mxu0 0.0
    %1207 = vmatprep.subr.mxu0 0.0
    %1208 = vmatpush2.msra.mxu0 0.0
    %1209 = vmatprep.subr.mxu0 0.0
    %1210 = vmatpush2.msra.mxu0 0.0
    %1211 = vmatprep.subr.mxu0 0.0
    %1212 = vmatpush2.msra.mxu0 0.0
    %1213 = vmatprep.subr.mxu0 0.0
    %1214 = vmatpush2.msra.mxu0 0.0
    %1215 = vmatprep.subr.mxu0 0.0
    %1216 = vmatpush2.msra.mxu0 0.0
    %1217 = vmatprep.subr.mxu0 0.0
    %1218 = vmatpush2.msra.mxu0 0.0
    %1219 = vmatprep.subr.mxu0 0.0
    %1220 = vmatpush2.msra.mxu0 0.0
    %1221 = vmatprep.subr.mxu0 0.0
    %1222 = vmatpush2.msra.mxu0 0.0
    %1223 = vmatprep.subr.mxu0 0.0
    %1224 = vmatpush2.msra.mxu0 0.0
    %1225 = vmatprep.subr.mxu0 0.0
    %1226 = vmatpush2.msra.mxu0 0.0
    %1227 = vmatprep.subr.mxu0 0.0
    %1228 = vmatpush2.msra.mxu0 0.0
    %1229 = vmatprep.subr.mxu0 0.0
    %1230 = vmatpush2.msra.mxu0 0.0
    %1231 = vmatprep.subr.mxu0 0.0
    %1232 = vmatpush2.msra.mxu0 0.0
    %1233 = vmatprep.mubr.f32.mxu0 0.0
    %1234 = vmatmul.mubr.f32.gmra.mxu0 %v1164
    %v1235 = vpop.f32.mrf.mxu0
    %v1236 = vadd.f32 %v1162, %v1235
    %v1237 = vpop.f32.mrf.mxu0
    %1238 = vmatprep.mubr.f32.mxu0 0.0
    %1239 = vmatmul.mubr.f32.gmra.mxu0 %v1167
    %v1240 = vpop.f32.mrf.mxu0
    %v1241 = vadd.f32 %v1162, %v1240
    %v1242 = vpop.f32.mrf.mxu0
    %1243 = vdwg.mxu0
    %v1244 = vld [vmem:[#allocation8 + $0x60] sm:$0xff]
    %v1245 = vld [vmem:[#allocation8 + $0x68] sm:$0xff]
    %v1246 = vld [vmem:[#allocation8 + $0x70] sm:$0xff]
    %v1247 = vld [vmem:[#allocation8 + $0x78] sm:$0xff]
    %v1248 = vld [vmem:[#allocation9 + $0x3] sm:$0x1]
    %v1249 = vlaneseq
    %v1250 = vshrl.u32 %v1249, 7
    %v1251 = vsub.s32 0, %v1250
    %v1252 = vrot.slane %v1248, %v1251
    %v1254 = vsel %vm98, %v75, 0
    %v1257 = vsel %vm98, %v76, 0
    %1259 = vmatprep.subr.mxu0 0.0
    %1260 = vmatpush1.msra.mxu0 0.0
    %1261 = vmatprep.subr.mxu0 0.0
    %1262 = vmatpush1.msra.mxu0 0.0
    %1263 = vmatprep.subr.mxu0 0.0
    %1264 = vmatpush1.msra.mxu0 0.0
    %1265 = vmatprep.subr.mxu0 0.0
    %1266 = vmatpush1.msra.mxu0 0.0
    %1267 = vmatprep.subr.mxu0 0.0
    %1268 = vmatpush1.msra.mxu0 0.0
    %1269 = vmatprep.subr.mxu0 0.0
    %1270 = vmatpush1.msra.mxu0 0.0
    %1271 = vmatprep.subr.mxu0 0.0
    %1272 = vmatpush1.msra.mxu0 0.0
    %1273 = vmatprep.subr.mxu0 0.0
    %1274 = vmatpush1.msra.mxu0 0.0
    %1275 = vmatprep.subr.mxu0 0.0
    %1276 = vmatpush1.msra.mxu0 0.0
    %1277 = vmatprep.subr.mxu0 0.0
    %1278 = vmatpush1.msra.mxu0 0.0
    %1279 = vmatprep.subr.mxu0 0.0
    %1280 = vmatpush1.msra.mxu0 0.0
    %1281 = vmatprep.subr.mxu0 0.0
    %1282 = vmatpush1.msra.mxu0 0.0
    %1283 = vmatprep.subr.mxu0 0.0
    %1284 = vmatpush1.msra.mxu0 %v1247
    %1285 = vmatprep.subr.mxu0 0.0
    %1286 = vmatpush1.msra.mxu0 %v1246
    %1287 = vmatprep.subr.mxu0 0.0
    %1288 = vmatpush1.msra.mxu0 %v1245
    %1289 = vmatprep.subr.mxu0 0.0
    %1290 = vmatpush1.msra.mxu0 %v1244
    %1291 = vmatprep.subr.mxu0 0.0
    %1292 = vmatpush2.msra.mxu0 0.0
    %1293 = vmatprep.subr.mxu0 0.0
    %1294 = vmatpush2.msra.mxu0 0.0
    %1295 = vmatprep.subr.mxu0 0.0
    %1296 = vmatpush2.msra.mxu0 0.0
    %1297 = vmatprep.subr.mxu0 0.0
    %1298 = vmatpush2.msra.mxu0 0.0
    %1299 = vmatprep.subr.mxu0 0.0
    %1300 = vmatpush2.msra.mxu0 0.0
    %1301 = vmatprep.subr.mxu0 0.0
    %1302 = vmatpush2.msra.mxu0 0.0
    %1303 = vmatprep.subr.mxu0 0.0
    %1304 = vmatpush2.msra.mxu0 0.0
    %1305 = vmatprep.subr.mxu0 0.0
    %1306 = vmatpush2.msra.mxu0 0.0
    %1307 = vmatprep.subr.mxu0 0.0
    %1308 = vmatpush2.msra.mxu0 0.0
    %1309 = vmatprep.subr.mxu0 0.0
    %1310 = vmatpush2.msra.mxu0 0.0
    %1311 = vmatprep.subr.mxu0 0.0
    %1312 = vmatpush2.msra.mxu0 0.0
    %1313 = vmatprep.subr.mxu0 0.0
    %1314 = vmatpush2.msra.mxu0 0.0
    %1315 = vmatprep.subr.mxu0 0.0
    %1316 = vmatpush2.msra.mxu0 0.0
    %1317 = vmatprep.subr.mxu0 0.0
    %1318 = vmatpush2.msra.mxu0 0.0
    %1319 = vmatprep.subr.mxu0 0.0
    %1320 = vmatpush2.msra.mxu0 0.0
    %1321 = vmatprep.subr.mxu0 0.0
    %1322 = vmatpush2.msra.mxu0 0.0
    %1323 = vmatprep.mubr.f32.mxu0 0.0
    %1324 = vmatmul.mubr.f32.gmra.mxu0 %v1254
    %v1325 = vpop.f32.mrf.mxu0
    %v1326 = vadd.f32 %v1252, %v1325
    %v1327 = vpop.f32.mrf.mxu0
    %1328 = vmatprep.mubr.f32.mxu0 0.0
    %1329 = vmatmul.mubr.f32.gmra.mxu0 %v1257
    %v1330 = vpop.f32.mrf.mxu0
    %v1331 = vadd.f32 %v1252, %v1330
    %v1332 = vpop.f32.mrf.mxu0
    %1333 = vdwg.mxu0
    %v1334 = vmul.f32 %v1236, 0.35355338
    %v1335 = vmul.f32 %v1241, 0.35355338
    %v1337 = vsel %vm188, %v1334, 0
    %v1340 = vsel %vm188, %v1335, 0
    %v1343 = vsel %vm188, %v1326, 0
    %v1346 = vsel %vm188, %v1331, 0
    %1348 = vmatprep.subr.mxu0 0.0
    %1349 = vmatpush1.xpose.msra.mxu0 0.0
    %1350 = vmatprep.subr.mxu0 0.0
    %1351 = vmatpush1.xpose.msra.mxu0 0.0
    %1352 = vmatprep.subr.mxu0 0.0
    %1353 = vmatpush1.xpose.msra.mxu0 0.0
    %1354 = vmatprep.subr.mxu0 0.0
    %1355 = vmatpush1.xpose.msra.mxu0 0.0
    %1356 = vmatprep.subr.mxu0 0.0
    %1357 = vmatpush1.xpose.msra.mxu0 0.0
    %1358 = vmatprep.subr.mxu0 0.0
    %1359 = vmatpush1.xpose.msra.mxu0 0.0
    %1360 = vmatprep.subr.mxu0 0.0
    %1361 = vmatpush1.xpose.msra.mxu0 0.0
    %1362 = vmatprep.subr.mxu0 0.0
    %1363 = vmatpush1.xpose.msra.mxu0 0.0
    %1364 = vmatprep.subr.mxu0 0.0
    %1365 = vmatpush1.xpose.msra.mxu0 0.0
    %1366 = vmatprep.subr.mxu0 0.0
    %1367 = vmatpush1.xpose.msra.mxu0 0.0
    %1368 = vmatprep.subr.mxu0 0.0
    %1369 = vmatpush1.xpose.msra.mxu0 0.0
    %1370 = vmatprep.subr.mxu0 0.0
    %1371 = vmatpush1.xpose.msra.mxu0 0.0
    %1372 = vmatprep.subr.mxu0 0.0
    %1373 = vmatpush1.xpose.msra.mxu0 0.0
    %1374 = vmatprep.subr.mxu0 0.0
    %1375 = vmatpush1.xpose.msra.mxu0 0.0
    %1376 = vmatprep.subr.mxu0 0.0
    %1377 = vmatpush1.xpose.msra.mxu0 %v1346
    %1378 = vmatprep.subr.mxu0 0.0
    %1379 = vmatpush1.xpose.msra.mxu0 %v1343
    %1380 = vmatprep.subr.mxu0 0.0
    %1381 = vmatpush2.xpose.msra.mxu0 0.0
    %1382 = vmatprep.subr.mxu0 0.0
    %1383 = vmatpush2.xpose.msra.mxu0 0.0
    %1384 = vmatprep.subr.mxu0 0.0
    %1385 = vmatpush2.xpose.msra.mxu0 0.0
    %1386 = vmatprep.subr.mxu0 0.0
    %1387 = vmatpush2.xpose.msra.mxu0 0.0
    %1388 = vmatprep.subr.mxu0 0.0
    %1389 = vmatpush2.xpose.msra.mxu0 0.0
    %1390 = vmatprep.subr.mxu0 0.0
    %1391 = vmatpush2.xpose.msra.mxu0 0.0
    %1392 = vmatprep.subr.mxu0 0.0
    %1393 = vmatpush2.xpose.msra.mxu0 0.0
    %1394 = vmatprep.subr.mxu0 0.0
    %1395 = vmatpush2.xpose.msra.mxu0 0.0
    %1396 = vmatprep.subr.mxu0 0.0
    %1397 = vmatpush2.xpose.msra.mxu0 0.0
    %1398 = vmatprep.subr.mxu0 0.0
    %1399 = vmatpush2.xpose.msra.mxu0 0.0
    %1400 = vmatprep.subr.mxu0 0.0
    %1401 = vmatpush2.xpose.msra.mxu0 0.0
    %1402 = vmatprep.subr.mxu0 0.0
    %1403 = vmatpush2.xpose.msra.mxu0 0.0
    %1404 = vmatprep.subr.mxu0 0.0
    %1405 = vmatpush2.xpose.msra.mxu0 0.0
    %1406 = vmatprep.subr.mxu0 0.0
    %1407 = vmatpush2.xpose.msra.mxu0 0.0
    %1408 = vmatprep.subr.mxu0 0.0
    %1409 = vmatpush2.xpose.msra.mxu0 0.0
    %1410 = vmatprep.subr.mxu0 0.0
    %1411 = vmatpush2.xpose.msra.mxu0 0.0
    %1412 = vmatprep.mubr.f32.mxu0 0.0
    %1413 = vmatmul.mubr.f32.gmra.mxu0 %v1337
    %v1414 = vpop.f32.mrf.mxu0
    %v1415 = vadd.f32 %v87, %v1414
    %v1416 = vpop.f32.mrf.mxu0
    %1417 = vmatprep.mubr.f32.mxu0 0.0
    %1418 = vmatmul.mubr.f32.gmra.mxu0 %v1340
    %v1419 = vpop.f32.mrf.mxu0
    %v1420 = vadd.f32 %v88, %v1419
    %v1421 = vpop.f32.mrf.mxu0
    %1422 = vdwg.mxu0
    %v1423 = vsel %vm274, %v1415, -inf
    %1424 = vmax.xlane.f32.xlu0 %v1423
    %v1425 = vpop.xlane.xlu0 %1424
    %v1426 = vsel %vm274, %v1420, -inf
    %1427 = vmax.xlane.f32.xlu0 %v1426
    %v1428 = vpop.xlane.xlu0 %1427
    %v1429 = vsub.f32 %v1415, %v1425
    %v1430 = vsub.f32 %v1420, %v1428
    %v1431 = vmul.f32 %v1429, 1.442695
    %v1432 = vpow.pop %v1431
    %v1433 = vmul.f32 %v1430, 1.442695
    %v1434 = vpow.pop %v1433
    %v1435 = vsel %vm274, %v1432, 0.0
    %1436 = vadd.xlane.f32.xlu0 %v1435
    %v1437 = vpop.xlane.xlu0 %1436
    %v1438 = vsel %vm274, %v1434, 0.0
    %1439 = vadd.xlane.f32.xlu0 %v1438
    %v1440 = vpop.xlane.xlu0 %1439
    %v1441 = vrcp.pop %v1437
    %v1442 = vmul.f32 %v1432, %v1441
    %v1443 = vrcp.pop %v1440
    %v1444 = vmul.f32 %v1434, %v1443
    %1445 = vrot.lane.b32.xlu0 %v1326, 96
    %v1446 = vpop.permute.xlu0 %1445
    %1447 = vrot.lane.b32.xlu0 %v1331, 96
    %v1448 = vpop.permute.xlu0 %1447
    %v1452 = vsel %vm274, %v1442, 0
    %v1455 = vsel %vm274, %v1444, 0
    %1457 = vmatprep.subr.mxu0 0.0
    %1458 = vmatpush1.msra.mxu0 0.0
    %1459 = vmatprep.subr.mxu0 0.0
    %1460 = vmatpush1.msra.mxu0 0.0
    %1461 = vmatprep.subr.mxu0 0.0
    %1462 = vmatpush1.msra.mxu0 0.0
    %1463 = vmatprep.subr.mxu0 0.0
    %1464 = vmatpush1.msra.mxu0 0.0
    %1465 = vmatprep.subr.mxu0 0.0
    %1466 = vmatpush1.msra.mxu0 0.0
    %1467 = vmatprep.subr.mxu0 0.0
    %1468 = vmatpush1.msra.mxu0 0.0
    %1469 = vmatprep.subr.mxu0 0.0
    %1470 = vmatpush1.msra.mxu0 0.0
    %1471 = vmatprep.subr.mxu0 0.0
    %1472 = vmatpush1.msra.mxu0 0.0
    %1473 = vmatprep.subr.mxu0 0.0
    %1474 = vmatpush1.msra.mxu0 0.0
    %1475 = vmatprep.subr.mxu0 0.0
    %1476 = vmatpush1.msra.mxu0 0.0
    %1477 = vmatprep.subr.mxu0 0.0
    %1478 = vmatpush1.msra.mxu0 0.0
    %1479 = vmatprep.subr.mxu0 0.0
    %1480 = vmatpush1.msra.mxu0 0.0
    %1481 = vmatprep.subr.mxu0 0.0
    %1482 = vmatpush1.msra.mxu0 0.0
    %1483 = vmatprep.subr.mxu0 0.0
    %1484 = vmatpush1.msra.mxu0 0.0
    %1485 = vmatprep.subr.mxu0 0.0
    %1486 = vmatpush1.msra.mxu0 %v1448
    %1487 = vmatprep.subr.mxu0 0.0
    %1488 = vmatpush1.msra.mxu0 %v1446
    %1489 = vmatprep.subr.mxu0 0.0
    %1490 = vmatpush2.msra.mxu0 0.0
    %1491 = vmatprep.subr.mxu0 0.0
    %1492 = vmatpush2.msra.mxu0 0.0
    %1493 = vmatprep.subr.mxu0 0.0
    %1494 = vmatpush2.msra.mxu0 0.0
    %1495 = vmatprep.subr.mxu0 0.0
    %1496 = vmatpush2.msra.mxu0 0.0
    %1497 = vmatprep.subr.mxu0 0.0
    %1498 = vmatpush2.msra.mxu0 0.0
    %1499 = vmatprep.subr.mxu0 0.0
    %1500 = vmatpush2.msra.mxu0 0.0
    %1501 = vmatprep.subr.mxu0 0.0
    %1502 = vmatpush2.msra.mxu0 0.0
    %1503 = vmatprep.subr.mxu0 0.0
    %1504 = vmatpush2.msra.mxu0 0.0
    %1505 = vmatprep.subr.mxu0 0.0
    %1506 = vmatpush2.msra.mxu0 0.0
    %1507 = vmatprep.subr.mxu0 0.0
    %1508 = vmatpush2.msra.mxu0 0.0
    %1509 = vmatprep.subr.mxu0 0.0
    %1510 = vmatpush2.msra.mxu0 0.0
    %1511 = vmatprep.subr.mxu0 0.0
    %1512 = vmatpush2.msra.mxu0 0.0
    %1513 = vmatprep.subr.mxu0 0.0
    %1514 = vmatpush2.msra.mxu0 0.0
    %1515 = vmatprep.subr.mxu0 0.0
    %1516 = vmatpush2.msra.mxu0 0.0
    %1517 = vmatprep.subr.mxu0 0.0
    %1518 = vmatpush2.msra.mxu0 0.0
    %1519 = vmatprep.subr.mxu0 0.0
    %1520 = vmatpush2.msra.mxu0 0.0
    %1521 = vmatprep.mubr.f32.mxu0 0.0
    %1522 = vmatmul.mubr.f32.gmra.mxu0 %v1452
    %v1523 = vpop.f32.mrf.mxu0
    %v1524 = vadd.f32 0.0, %v1523
    %v1525 = vpop.f32.mrf.mxu0
    %1526 = vmatprep.mubr.f32.mxu0 0.0
    %1527 = vmatmul.mubr.f32.gmra.mxu0 %v1455
    %v1528 = vpop.f32.mrf.mxu0
    %v1529 = vadd.f32 0.0, %v1528
    %v1530 = vpop.f32.mrf.mxu0
    %1531 = vdwg.mxu0
    %1532 = vst.msk [vmem:[#allocation2] sm:$0xff] %vm188, %v1524
    %1533 = vst.msk [vmem:[#allocation2 + $0x8] sm:$0xff] %vm188, %v1529
    %1534 = vrot.lane.b32.xlu0 %v1334, 120
    %v1535 = vpop.permute.xlu0 %1534
    %1536 = vrot.lane.b32.xlu0 %v1335, 120
    %v1537 = vpop.permute.xlu0 %1536
    %1538 = vrot.lane.b32.xlu0 %v1326, 120
    %v1539 = vpop.permute.xlu0 %1538
    %1540 = vrot.lane.b32.xlu0 %v1331, 120
    %v1541 = vpop.permute.xlu0 %1540
    %v1542 = vsel %vm188, %v1535, 0
    %v1544 = vsel %vm188, %v1537, 0
    %v1546 = vsel %vm188, %v1539, 0
    %v1548 = vsel %vm188, %v1541, 0
    %1550 = vmatprep.subr.mxu0 0.0
    %1551 = vmatpush1.xpose.msra.mxu0 0.0
    %1552 = vmatprep.subr.mxu0 0.0
    %1553 = vmatpush1.xpose.msra.mxu0 0.0
    %1554 = vmatprep.subr.mxu0 0.0
    %1555 = vmatpush1.xpose.msra.mxu0 0.0
    %1556 = vmatprep.subr.mxu0 0.0
    %1557 = vmatpush1.xpose.msra.mxu0 0.0
    %1558 = vmatprep.subr.mxu0 0.0
    %1559 = vmatpush1.xpose.msra.mxu0 0.0
    %1560 = vmatprep.subr.mxu0 0.0
    %1561 = vmatpush1.xpose.msra.mxu0 0.0
    %1562 = vmatprep.subr.mxu0 0.0
    %1563 = vmatpush1.xpose.msra.mxu0 0.0
    %1564 = vmatprep.subr.mxu0 0.0
    %1565 = vmatpush1.xpose.msra.mxu0 0.0
    %1566 = vmatprep.subr.mxu0 0.0
    %1567 = vmatpush1.xpose.msra.mxu0 0.0
    %1568 = vmatprep.subr.mxu0 0.0
    %1569 = vmatpush1.xpose.msra.mxu0 0.0
    %1570 = vmatprep.subr.mxu0 0.0
    %1571 = vmatpush1.xpose.msra.mxu0 0.0
    %1572 = vmatprep.subr.mxu0 0.0
    %1573 = vmatpush1.xpose.msra.mxu0 0.0
    %1574 = vmatprep.subr.mxu0 0.0
    %1575 = vmatpush1.xpose.msra.mxu0 0.0
    %1576 = vmatprep.subr.mxu0 0.0
    %1577 = vmatpush1.xpose.msra.mxu0 0.0
    %1578 = vmatprep.subr.mxu0 0.0
    %1579 = vmatpush1.xpose.msra.mxu0 %v1548
    %1580 = vmatprep.subr.mxu0 0.0
    %1581 = vmatpush1.xpose.msra.mxu0 %v1546
    %1582 = vmatprep.subr.mxu0 0.0
    %1583 = vmatpush2.xpose.msra.mxu0 0.0
    %1584 = vmatprep.subr.mxu0 0.0
    %1585 = vmatpush2.xpose.msra.mxu0 0.0
    %1586 = vmatprep.subr.mxu0 0.0
    %1587 = vmatpush2.xpose.msra.mxu0 0.0
    %1588 = vmatprep.subr.mxu0 0.0
    %1589 = vmatpush2.xpose.msra.mxu0 0.0
    %1590 = vmatprep.subr.mxu0 0.0
    %1591 = vmatpush2.xpose.msra.mxu0 0.0
    %1592 = vmatprep.subr.mxu0 0.0
    %1593 = vmatpush2.xpose.msra.mxu0 0.0
    %1594 = vmatprep.subr.mxu0 0.0
    %1595 = vmatpush2.xpose.msra.mxu0 0.0
    %1596 = vmatprep.subr.mxu0 0.0
    %1597 = vmatpush2.xpose.msra.mxu0 0.0
    %1598 = vmatprep.subr.mxu0 0.0
    %1599 = vmatpush2.xpose.msra.mxu0 0.0
    %1600 = vmatprep.subr.mxu0 0.0
    %1601 = vmatpush2.xpose.msra.mxu0 0.0
    %1602 = vmatprep.subr.mxu0 0.0
    %1603 = vmatpush2.xpose.msra.mxu0 0.0
    %1604 = vmatprep.subr.mxu0 0.0
    %1605 = vmatpush2.xpose.msra.mxu0 0.0
    %1606 = vmatprep.subr.mxu0 0.0
    %1607 = vmatpush2.xpose.msra.mxu0 0.0
    %1608 = vmatprep.subr.mxu0 0.0
    %1609 = vmatpush2.xpose.msra.mxu0 0.0
    %1610 = vmatprep.subr.mxu0 0.0
    %1611 = vmatpush2.xpose.msra.mxu0 0.0
    %1612 = vmatprep.subr.mxu0 0.0
    %1613 = vmatpush2.xpose.msra.mxu0 0.0
    %1614 = vmatprep.mubr.f32.mxu0 0.0
    %1615 = vmatmul.mubr.f32.gmra.mxu0 %v1542
    %v1616 = vpop.f32.mrf.mxu0
    %v1617 = vadd.f32 %v87, %v1616
    %v1618 = vpop.f32.mrf.mxu0
    %1619 = vmatprep.mubr.f32.mxu0 0.0
    %1620 = vmatmul.mubr.f32.gmra.mxu0 %v1544
    %v1621 = vpop.f32.mrf.mxu0
    %v1622 = vadd.f32 %v88, %v1621
    %v1623 = vpop.f32.mrf.mxu0
    %1624 = vdwg.mxu0
    %v1625 = vsel %vm274, %v1617, -inf
    %1626 = vmax.xlane.f32.xlu0 %v1625
    %v1627 = vpop.xlane.xlu0 %1626
    %v1628 = vsel %vm274, %v1622, -inf
    %1629 = vmax.xlane.f32.xlu0 %v1628
    %v1630 = vpop.xlane.xlu0 %1629
    %v1631 = vsub.f32 %v1617, %v1627
    %v1632 = vsub.f32 %v1622, %v1630
    %v1633 = vmul.f32 %v1631, 1.442695
    %v1634 = vpow.pop %v1633
    %v1635 = vmul.f32 %v1632, 1.442695
    %v1636 = vpow.pop %v1635
    %v1637 = vsel %vm274, %v1634, 0.0
    %1638 = vadd.xlane.f32.xlu0 %v1637
    %v1639 = vpop.xlane.xlu0 %1638
    %v1640 = vsel %vm274, %v1636, 0.0
    %1641 = vadd.xlane.f32.xlu0 %v1640
    %v1642 = vpop.xlane.xlu0 %1641
    %v1643 = vrcp.pop %v1639
    %v1644 = vmul.f32 %v1634, %v1643
    %v1645 = vrcp.pop %v1642
    %v1646 = vmul.f32 %v1636, %v1645
    %1647 = vrot.lane.b32.xlu0 %v1326, 88
    %v1648 = vpop.permute.xlu0 %1647
    %1649 = vrot.lane.b32.xlu0 %v1331, 88
    %v1650 = vpop.permute.xlu0 %1649
    %v1654 = vsel %vm274, %v1644, 0
    %v1657 = vsel %vm274, %v1646, 0
    %1659 = vmatprep.subr.mxu0 0.0
    %1660 = vmatpush1.msra.mxu0 0.0
    %1661 = vmatprep.subr.mxu0 0.0
    %1662 = vmatpush1.msra.mxu0 0.0
    %1663 = vmatprep.subr.mxu0 0.0
    %1664 = vmatpush1.msra.mxu0 0.0
    %1665 = vmatprep.subr.mxu0 0.0
    %1666 = vmatpush1.msra.mxu0 0.0
    %1667 = vmatprep.subr.mxu0 0.0
    %1668 = vmatpush1.msra.mxu0 0.0
    %1669 = vmatprep.subr.mxu0 0.0
    %1670 = vmatpush1.msra.mxu0 0.0
    %1671 = vmatprep.subr.mxu0 0.0
    %1672 = vmatpush1.msra.mxu0 0.0
    %1673 = vmatprep.subr.mxu0 0.0
    %1674 = vmatpush1.msra.mxu0 0.0
    %1675 = vmatprep.subr.mxu0 0.0
    %1676 = vmatpush1.msra.mxu0 0.0
    %1677 = vmatprep.subr.mxu0 0.0
    %1678 = vmatpush1.msra.mxu0 0.0
    %1679 = vmatprep.subr.mxu0 0.0
    %1680 = vmatpush1.msra.mxu0 0.0
    %1681 = vmatprep.subr.mxu0 0.0
    %1682 = vmatpush1.msra.mxu0 0.0
    %1683 = vmatprep.subr.mxu0 0.0
    %1684 = vmatpush1.msra.mxu0 0.0
    %1685 = vmatprep.subr.mxu0 0.0
    %1686 = vmatpush1.msra.mxu0 0.0
    %1687 = vmatprep.subr.mxu0 0.0
    %1688 = vmatpush1.msra.mxu0 %v1650
    %1689 = vmatprep.subr.mxu0 0.0
    %1690 = vmatpush1.msra.mxu0 %v1648
    %1691 = vmatprep.subr.mxu0 0.0
    %1692 = vmatpush2.msra.mxu0 0.0
    %1693 = vmatprep.subr.mxu0 0.0
    %1694 = vmatpush2.msra.mxu0 0.0
    %1695 = vmatprep.subr.mxu0 0.0
    %1696 = vmatpush2.msra.mxu0 0.0
    %1697 = vmatprep.subr.mxu0 0.0
    %1698 = vmatpush2.msra.mxu0 0.0
    %1699 = vmatprep.subr.mxu0 0.0
    %1700 = vmatpush2.msra.mxu0 0.0
    %1701 = vmatprep.subr.mxu0 0.0
    %1702 = vmatpush2.msra.mxu0 0.0
    %1703 = vmatprep.subr.mxu0 0.0
    %1704 = vmatpush2.msra.mxu0 0.0
    %1705 = vmatprep.subr.mxu0 0.0
    %1706 = vmatpush2.msra.mxu0 0.0
    %1707 = vmatprep.subr.mxu0 0.0
    %1708 = vmatpush2.msra.mxu0 0.0
    %1709 = vmatprep.subr.mxu0 0.0
    %1710 = vmatpush2.msra.mxu0 0.0
    %1711 = vmatprep.subr.mxu0 0.0
    %1712 = vmatpush2.msra.mxu0 0.0
    %1713 = vmatprep.subr.mxu0 0.0
    %1714 = vmatpush2.msra.mxu0 0.0
    %1715 = vmatprep.subr.mxu0 0.0
    %1716 = vmatpush2.msra.mxu0 0.0
    %1717 = vmatprep.subr.mxu0 0.0
    %1718 = vmatpush2.msra.mxu0 0.0
    %1719 = vmatprep.subr.mxu0 0.0
    %1720 = vmatpush2.msra.mxu0 0.0
    %1721 = vmatprep.subr.mxu0 0.0
    %1722 = vmatpush2.msra.mxu0 0.0
    %1723 = vmatprep.mubr.f32.mxu0 0.0
    %1724 = vmatmul.mubr.f32.gmra.mxu0 %v1654
    %v1725 = vpop.f32.mrf.mxu0
    %v1726 = vadd.f32 0.0, %v1725
    %v1727 = vpop.f32.mrf.mxu0
    %1728 = vmatprep.mubr.f32.mxu0 0.0
    %1729 = vmatmul.mubr.f32.gmra.mxu0 %v1657
    %v1730 = vpop.f32.mrf.mxu0
    %v1731 = vadd.f32 0.0, %v1730
    %v1732 = vpop.f32.mrf.mxu0
    %1733 = vdwg.mxu0
    %1736 = vrot.lane.b32.xlu0 %v1726, 8
    %v1737 = vpop.permute.xlu0 %1736
    %1738 = vrot.lane.b32.xlu0 %v1731, 8
    %v1739 = vpop.permute.xlu0 %1738
    %1742 = vst.msk [vmem:[#allocation2] sm:$0xff] %vm594, %v1737
    %1743 = vst.msk [vmem:[#allocation2 + $0x8] sm:$0xff] %vm594, %v1739
    %1744 = vrot.lane.b32.xlu0 %v1334, 112
    %v1745 = vpop.permute.xlu0 %1744
    %1746 = vrot.lane.b32.xlu0 %v1335, 112
    %v1747 = vpop.permute.xlu0 %1746
    %1748 = vrot.lane.b32.xlu0 %v1326, 112
    %v1749 = vpop.permute.xlu0 %1748
    %1750 = vrot.lane.b32.xlu0 %v1331, 112
    %v1751 = vpop.permute.xlu0 %1750
    %v1752 = vsel %vm188, %v1745, 0
    %v1754 = vsel %vm188, %v1747, 0
    %v1756 = vsel %vm188, %v1749, 0
    %v1758 = vsel %vm188, %v1751, 0
    %1760 = vmatprep.subr.mxu0 0.0
    %1761 = vmatpush1.xpose.msra.mxu0 0.0
    %1762 = vmatprep.subr.mxu0 0.0
    %1763 = vmatpush1.xpose.msra.mxu0 0.0
    %1764 = vmatprep.subr.mxu0 0.0
    %1765 = vmatpush1.xpose.msra.mxu0 0.0
    %1766 = vmatprep.subr.mxu0 0.0
    %1767 = vmatpush1.xpose.msra.mxu0 0.0
    %1768 = vmatprep.subr.mxu0 0.0
    %1769 = vmatpush1.xpose.msra.mxu0 0.0
    %1770 = vmatprep.subr.mxu0 0.0
    %1771 = vmatpush1.xpose.msra.mxu0 0.0
    %1772 = vmatprep.subr.mxu0 0.0
    %1773 = vmatpush1.xpose.msra.mxu0 0.0
    %1774 = vmatprep.subr.mxu0 0.0
    %1775 = vmatpush1.xpose.msra.mxu0 0.0
    %1776 = vmatprep.subr.mxu0 0.0
    %1777 = vmatpush1.xpose.msra.mxu0 0.0
    %1778 = vmatprep.subr.mxu0 0.0
    %1779 = vmatpush1.xpose.msra.mxu0 0.0
    %1780 = vmatprep.subr.mxu0 0.0
    %1781 = vmatpush1.xpose.msra.mxu0 0.0
    %1782 = vmatprep.subr.mxu0 0.0
    %1783 = vmatpush1.xpose.msra.mxu0 0.0
    %1784 = vmatprep.subr.mxu0 0.0
    %1785 = vmatpush1.xpose.msra.mxu0 0.0
    %1786 = vmatprep.subr.mxu0 0.0
    %1787 = vmatpush1.xpose.msra.mxu0 0.0
    %1788 = vmatprep.subr.mxu0 0.0
    %1789 = vmatpush1.xpose.msra.mxu0 %v1758
    %1790 = vmatprep.subr.mxu0 0.0
    %1791 = vmatpush1.xpose.msra.mxu0 %v1756
    %1792 = vmatprep.subr.mxu0 0.0
    %1793 = vmatpush2.xpose.msra.mxu0 0.0
    %1794 = vmatprep.subr.mxu0 0.0
    %1795 = vmatpush2.xpose.msra.mxu0 0.0
    %1796 = vmatprep.subr.mxu0 0.0
    %1797 = vmatpush2.xpose.msra.mxu0 0.0
    %1798 = vmatprep.subr.mxu0 0.0
    %1799 = vmatpush2.xpose.msra.mxu0 0.0
    %1800 = vmatprep.subr.mxu0 0.0
    %1801 = vmatpush2.xpose.msra.mxu0 0.0
    %1802 = vmatprep.subr.mxu0 0.0
    %1803 = vmatpush2.xpose.msra.mxu0 0.0
    %1804 = vmatprep.subr.mxu0 0.0
    %1805 = vmatpush2.xpose.msra.mxu0 0.0
    %1806 = vmatprep.subr.mxu0 0.0
    %1807 = vmatpush2.xpose.msra.mxu0 0.0
    %1808 = vmatprep.subr.mxu0 0.0
    %1809 = vmatpush2.xpose.msra.mxu0 0.0
    %1810 = vmatprep.subr.mxu0 0.0
    %1811 = vmatpush2.xpose.msra.mxu0 0.0
    %1812 = vmatprep.subr.mxu0 0.0
    %1813 = vmatpush2.xpose.msra.mxu0 0.0
    %1814 = vmatprep.subr.mxu0 0.0
    %1815 = vmatpush2.xpose.msra.mxu0 0.0
    %1816 = vmatprep.subr.mxu0 0.0
    %1817 = vmatpush2.xpose.msra.mxu0 0.0
    %1818 = vmatprep.subr.mxu0 0.0
    %1819 = vmatpush2.xpose.msra.mxu0 0.0
    %1820 = vmatprep.subr.mxu0 0.0
    %1821 = vmatpush2.xpose.msra.mxu0 0.0
    %1822 = vmatprep.subr.mxu0 0.0
    %1823 = vmatpush2.xpose.msra.mxu0 0.0
    %1824 = vmatprep.mubr.f32.mxu0 0.0
    %1825 = vmatmul.mubr.f32.gmra.mxu0 %v1752
    %v1826 = vpop.f32.mrf.mxu0
    %v1827 = vadd.f32 %v87, %v1826
    %v1828 = vpop.f32.mrf.mxu0
    %1829 = vmatprep.mubr.f32.mxu0 0.0
    %1830 = vmatmul.mubr.f32.gmra.mxu0 %v1754
    %v1831 = vpop.f32.mrf.mxu0
    %v1832 = vadd.f32 %v88, %v1831
    %v1833 = vpop.f32.mrf.mxu0
    %1834 = vdwg.mxu0
    %v1835 = vsel %vm274, %v1827, -inf
    %1836 = vmax.xlane.f32.xlu0 %v1835
    %v1837 = vpop.xlane.xlu0 %1836
    %v1838 = vsel %vm274, %v1832, -inf
    %1839 = vmax.xlane.f32.xlu0 %v1838
    %v1840 = vpop.xlane.xlu0 %1839
    %v1841 = vsub.f32 %v1827, %v1837
    %v1842 = vsub.f32 %v1832, %v1840
    %v1843 = vmul.f32 %v1841, 1.442695
    %v1844 = vpow.pop %v1843
    %v1845 = vmul.f32 %v1842, 1.442695
    %v1846 = vpow.pop %v1845
    %v1847 = vsel %vm274, %v1844, 0.0
    %1848 = vadd.xlane.f32.xlu0 %v1847
    %v1849 = vpop.xlane.xlu0 %1848
    %v1850 = vsel %vm274, %v1846, 0.0
    %1851 = vadd.xlane.f32.xlu0 %v1850
    %v1852 = vpop.xlane.xlu0 %1851
    %v1853 = vrcp.pop %v1849
    %v1854 = vmul.f32 %v1844, %v1853
    %v1855 = vrcp.pop %v1852
    %v1856 = vmul.f32 %v1846, %v1855
    %1857 = vrot.lane.b32.xlu0 %v1326, 80
    %v1858 = vpop.permute.xlu0 %1857
    %1859 = vrot.lane.b32.xlu0 %v1331, 80
    %v1860 = vpop.permute.xlu0 %1859
    %v1864 = vsel %vm274, %v1854, 0
    %v1867 = vsel %vm274, %v1856, 0
    %1869 = vmatprep.subr.mxu0 0.0
    %1870 = vmatpush1.msra.mxu0 0.0
    %1871 = vmatprep.subr.mxu0 0.0
    %1872 = vmatpush1.msra.mxu0 0.0
    %1873 = vmatprep.subr.mxu0 0.0
    %1874 = vmatpush1.msra.mxu0 0.0
    %1875 = vmatprep.subr.mxu0 0.0
    %1876 = vmatpush1.msra.mxu0 0.0
    %1877 = vmatprep.subr.mxu0 0.0
    %1878 = vmatpush1.msra.mxu0 0.0
    %1879 = vmatprep.subr.mxu0 0.0
    %1880 = vmatpush1.msra.mxu0 0.0
    %1881 = vmatprep.subr.mxu0 0.0
    %1882 = vmatpush1.msra.mxu0 0.0
    %1883 = vmatprep.subr.mxu0 0.0
    %1884 = vmatpush1.msra.mxu0 0.0
    %1885 = vmatprep.subr.mxu0 0.0
    %1886 = vmatpush1.msra.mxu0 0.0
    %1887 = vmatprep.subr.mxu0 0.0
    %1888 = vmatpush1.msra.mxu0 0.0
    %1889 = vmatprep.subr.mxu0 0.0
    %1890 = vmatpush1.msra.mxu0 0.0
    %1891 = vmatprep.subr.mxu0 0.0
    %1892 = vmatpush1.msra.mxu0 0.0
    %1893 = vmatprep.subr.mxu0 0.0
    %1894 = vmatpush1.msra.mxu0 0.0
    %1895 = vmatprep.subr.mxu0 0.0
    %1896 = vmatpush1.msra.mxu0 0.0
    %1897 = vmatprep.subr.mxu0 0.0
    %1898 = vmatpush1.msra.mxu0 %v1860
    %1899 = vmatprep.subr.mxu0 0.0
    %1900 = vmatpush1.msra.mxu0 %v1858
    %1901 = vmatprep.subr.mxu0 0.0
    %1902 = vmatpush2.msra.mxu0 0.0
    %1903 = vmatprep.subr.mxu0 0.0
    %1904 = vmatpush2.msra.mxu0 0.0
    %1905 = vmatprep.subr.mxu0 0.0
    %1906 = vmatpush2.msra.mxu0 0.0
    %1907 = vmatprep.subr.mxu0 0.0
    %1908 = vmatpush2.msra.mxu0 0.0
    %1909 = vmatprep.subr.mxu0 0.0
    %1910 = vmatpush2.msra.mxu0 0.0
    %1911 = vmatprep.subr.mxu0 0.0
    %1912 = vmatpush2.msra.mxu0 0.0
    %1913 = vmatprep.subr.mxu0 0.0
    %1914 = vmatpush2.msra.mxu0 0.0
    %1915 = vmatprep.subr.mxu0 0.0
    %1916 = vmatpush2.msra.mxu0 0.0
    %1917 = vmatprep.subr.mxu0 0.0
    %1918 = vmatpush2.msra.mxu0 0.0
    %1919 = vmatprep.subr.mxu0 0.0
    %1920 = vmatpush2.msra.mxu0 0.0
    %1921 = vmatprep.subr.mxu0 0.0
    %1922 = vmatpush2.msra.mxu0 0.0
    %1923 = vmatprep.subr.mxu0 0.0
    %1924 = vmatpush2.msra.mxu0 0.0
    %1925 = vmatprep.subr.mxu0 0.0
    %1926 = vmatpush2.msra.mxu0 0.0
    %1927 = vmatprep.subr.mxu0 0.0
    %1928 = vmatpush2.msra.mxu0 0.0
    %1929 = vmatprep.subr.mxu0 0.0
    %1930 = vmatpush2.msra.mxu0 0.0
    %1931 = vmatprep.subr.mxu0 0.0
    %1932 = vmatpush2.msra.mxu0 0.0
    %1933 = vmatprep.mubr.f32.mxu0 0.0
    %1934 = vmatmul.mubr.f32.gmra.mxu0 %v1864
    %v1935 = vpop.f32.mrf.mxu0
    %v1936 = vadd.f32 0.0, %v1935
    %v1937 = vpop.f32.mrf.mxu0
    %1938 = vmatprep.mubr.f32.mxu0 0.0
    %1939 = vmatmul.mubr.f32.gmra.mxu0 %v1867
    %v1940 = vpop.f32.mrf.mxu0
    %v1941 = vadd.f32 0.0, %v1940
    %v1942 = vpop.f32.mrf.mxu0
    %1943 = vdwg.mxu0
    %1946 = vrot.lane.b32.xlu0 %v1936, 16
    %v1947 = vpop.permute.xlu0 %1946
    %1948 = vrot.lane.b32.xlu0 %v1941, 16
    %v1949 = vpop.permute.xlu0 %1948
    %1952 = vst.msk [vmem:[#allocation2] sm:$0xff] %vm805, %v1947
    %1953 = vst.msk [vmem:[#allocation2 + $0x8] sm:$0xff] %vm805, %v1949
    %1954 = vrot.lane.b32.xlu0 %v1334, 104
    %v1955 = vpop.permute.xlu0 %1954
    %1956 = vrot.lane.b32.xlu0 %v1335, 104
    %v1957 = vpop.permute.xlu0 %1956
    %1958 = vrot.lane.b32.xlu0 %v1326, 104
    %v1959 = vpop.permute.xlu0 %1958
    %1960 = vrot.lane.b32.xlu0 %v1331, 104
    %v1961 = vpop.permute.xlu0 %1960
    %v1962 = vsel %vm188, %v1955, 0
    %v1964 = vsel %vm188, %v1957, 0
    %v1966 = vsel %vm188, %v1959, 0
    %v1968 = vsel %vm188, %v1961, 0
    %1970 = vmatprep.subr.mxu0 0.0
    %1971 = vmatpush1.xpose.msra.mxu0 0.0
    %1972 = vmatprep.subr.mxu0 0.0
    %1973 = vmatpush1.xpose.msra.mxu0 0.0
    %1974 = vmatprep.subr.mxu0 0.0
    %1975 = vmatpush1.xpose.msra.mxu0 0.0
    %1976 = vmatprep.subr.mxu0 0.0
    %1977 = vmatpush1.xpose.msra.mxu0 0.0
    %1978 = vmatprep.subr.mxu0 0.0
    %1979 = vmatpush1.xpose.msra.mxu0 0.0
    %1980 = vmatprep.subr.mxu0 0.0
    %1981 = vmatpush1.xpose.msra.mxu0 0.0
    %1982 = vmatprep.subr.mxu0 0.0
    %1983 = vmatpush1.xpose.msra.mxu0 0.0
    %1984 = vmatprep.subr.mxu0 0.0
    %1985 = vmatpush1.xpose.msra.mxu0 0.0
    %1986 = vmatprep.subr.mxu0 0.0
    %1987 = vmatpush1.xpose.msra.mxu0 0.0
    %1988 = vmatprep.subr.mxu0 0.0
    %1989 = vmatpush1.xpose.msra.mxu0 0.0
    %1990 = vmatprep.subr.mxu0 0.0
    %1991 = vmatpush1.xpose.msra.mxu0 0.0
    %1992 = vmatprep.subr.mxu0 0.0
    %1993 = vmatpush1.xpose.msra.mxu0 0.0
    %1994 = vmatprep.subr.mxu0 0.0
    %1995 = vmatpush1.xpose.msra.mxu0 0.0
    %1996 = vmatprep.subr.mxu0 0.0
    %1997 = vmatpush1.xpose.msra.mxu0 0.0
    %1998 = vmatprep.subr.mxu0 0.0
    %1999 = vmatpush1.xpose.msra.mxu0 %v1968
    %2000 = vmatprep.subr.mxu0 0.0
    %2001 = vmatpush1.xpose.msra.mxu0 %v1966
    %2002 = vmatprep.subr.mxu0 0.0
    %2003 = vmatpush2.xpose.msra.mxu0 0.0
    %2004 = vmatprep.subr.mxu0 0.0
    %2005 = vmatpush2.xpose.msra.mxu0 0.0
    %2006 = vmatprep.subr.mxu0 0.0
    %2007 = vmatpush2.xpose.msra.mxu0 0.0
    %2008 = vmatprep.subr.mxu0 0.0
    %2009 = vmatpush2.xpose.msra.mxu0 0.0
    %2010 = vmatprep.subr.mxu0 0.0
    %2011 = vmatpush2.xpose.msra.mxu0 0.0
    %2012 = vmatprep.subr.mxu0 0.0
    %2013 = vmatpush2.xpose.msra.mxu0 0.0
    %2014 = vmatprep.subr.mxu0 0.0
    %2015 = vmatpush2.xpose.msra.mxu0 0.0
    %2016 = vmatprep.subr.mxu0 0.0
    %2017 = vmatpush2.xpose.msra.mxu0 0.0
    %2018 = vmatprep.subr.mxu0 0.0
    %2019 = vmatpush2.xpose.msra.mxu0 0.0
    %2020 = vmatprep.subr.mxu0 0.0
    %2021 = vmatpush2.xpose.msra.mxu0 0.0
    %2022 = vmatprep.subr.mxu0 0.0
    %2023 = vmatpush2.xpose.msra.mxu0 0.0
    %2024 = vmatprep.subr.mxu0 0.0
    %2025 = vmatpush2.xpose.msra.mxu0 0.0
    %2026 = vmatprep.subr.mxu0 0.0
    %2027 = vmatpush2.xpose.msra.mxu0 0.0
    %2028 = vmatprep.subr.mxu0 0.0
    %2029 = vmatpush2.xpose.msra.mxu0 0.0
    %2030 = vmatprep.subr.mxu0 0.0
    %2031 = vmatpush2.xpose.msra.mxu0 0.0
    %2032 = vmatprep.subr.mxu0 0.0
    %2033 = vmatpush2.xpose.msra.mxu0 0.0
    %2034 = vmatprep.mubr.f32.mxu0 0.0
    %2035 = vmatmul.mubr.f32.gmra.mxu0 %v1962
    %v2036 = vpop.f32.mrf.mxu0
    %v2037 = vadd.f32 %v87, %v2036
    %v2038 = vpop.f32.mrf.mxu0
    %2039 = vmatprep.mubr.f32.mxu0 0.0
    %2040 = vmatmul.mubr.f32.gmra.mxu0 %v1964
    %v2041 = vpop.f32.mrf.mxu0
    %v2042 = vadd.f32 %v88, %v2041
    %v2043 = vpop.f32.mrf.mxu0
    %2044 = vdwg.mxu0
    %v2045 = vsel %vm274, %v2037, -inf
    %2046 = vmax.xlane.f32.xlu0 %v2045
    %v2047 = vpop.xlane.xlu0 %2046
    %v2048 = vsel %vm274, %v2042, -inf
    %2049 = vmax.xlane.f32.xlu0 %v2048
    %v2050 = vpop.xlane.xlu0 %2049
    %v2051 = vsub.f32 %v2037, %v2047
    %v2052 = vsub.f32 %v2042, %v2050
    %v2053 = vmul.f32 %v2051, 1.442695
    %v2054 = vpow.pop %v2053
    %v2055 = vmul.f32 %v2052, 1.442695
    %v2056 = vpow.pop %v2055
    %v2057 = vsel %vm274, %v2054, 0.0
    %2058 = vadd.xlane.f32.xlu0 %v2057
    %v2059 = vpop.xlane.xlu0 %2058
    %v2060 = vsel %vm274, %v2056, 0.0
    %2061 = vadd.xlane.f32.xlu0 %v2060
    %v2062 = vpop.xlane.xlu0 %2061
    %v2063 = vrcp.pop %v2059
    %v2064 = vmul.f32 %v2054, %v2063
    %v2065 = vrcp.pop %v2062
    %v2066 = vmul.f32 %v2056, %v2065
    %2067 = vrot.lane.b32.xlu0 %v1326, 72
    %v2068 = vpop.permute.xlu0 %2067
    %2069 = vrot.lane.b32.xlu0 %v1331, 72
    %v2070 = vpop.permute.xlu0 %2069
    %v2074 = vsel %vm274, %v2064, 0
    %v2077 = vsel %vm274, %v2066, 0
    %2079 = vmatprep.subr.mxu0 0.0
    %2080 = vmatpush1.msra.mxu0 0.0
    %2081 = vmatprep.subr.mxu0 0.0
    %2082 = vmatpush1.msra.mxu0 0.0
    %2083 = vmatprep.subr.mxu0 0.0
    %2084 = vmatpush1.msra.mxu0 0.0
    %2085 = vmatprep.subr.mxu0 0.0
    %2086 = vmatpush1.msra.mxu0 0.0
    %2087 = vmatprep.subr.mxu0 0.0
    %2088 = vmatpush1.msra.mxu0 0.0
    %2089 = vmatprep.subr.mxu0 0.0
    %2090 = vmatpush1.msra.mxu0 0.0
    %2091 = vmatprep.subr.mxu0 0.0
    %2092 = vmatpush1.msra.mxu0 0.0
    %2093 = vmatprep.subr.mxu0 0.0
    %2094 = vmatpush1.msra.mxu0 0.0
    %2095 = vmatprep.subr.mxu0 0.0
    %2096 = vmatpush1.msra.mxu0 0.0
    %2097 = vmatprep.subr.mxu0 0.0
    %2098 = vmatpush1.msra.mxu0 0.0
    %2099 = vmatprep.subr.mxu0 0.0
    %2100 = vmatpush1.msra.mxu0 0.0
    %2101 = vmatprep.subr.mxu0 0.0
    %2102 = vmatpush1.msra.mxu0 0.0
    %2103 = vmatprep.subr.mxu0 0.0
    %2104 = vmatpush1.msra.mxu0 0.0
    %2105 = vmatprep.subr.mxu0 0.0
    %2106 = vmatpush1.msra.mxu0 0.0
    %2107 = vmatprep.subr.mxu0 0.0
    %2108 = vmatpush1.msra.mxu0 %v2070
    %2109 = vmatprep.subr.mxu0 0.0
    %2110 = vmatpush1.msra.mxu0 %v2068
    %2111 = vmatprep.subr.mxu0 0.0
    %2112 = vmatpush2.msra.mxu0 0.0
    %2113 = vmatprep.subr.mxu0 0.0
    %2114 = vmatpush2.msra.mxu0 0.0
    %2115 = vmatprep.subr.mxu0 0.0
    %2116 = vmatpush2.msra.mxu0 0.0
    %2117 = vmatprep.subr.mxu0 0.0
    %2118 = vmatpush2.msra.mxu0 0.0
    %2119 = vmatprep.subr.mxu0 0.0
    %2120 = vmatpush2.msra.mxu0 0.0
    %2121 = vmatprep.subr.mxu0 0.0
    %2122 = vmatpush2.msra.mxu0 0.0
    %2123 = vmatprep.subr.mxu0 0.0
    %2124 = vmatpush2.msra.mxu0 0.0
    %2125 = vmatprep.subr.mxu0 0.0
    %2126 = vmatpush2.msra.mxu0 0.0
    %2127 = vmatprep.subr.mxu0 0.0
    %2128 = vmatpush2.msra.mxu0 0.0
    %2129 = vmatprep.subr.mxu0 0.0
    %2130 = vmatpush2.msra.mxu0 0.0
    %2131 = vmatprep.subr.mxu0 0.0
    %2132 = vmatpush2.msra.mxu0 0.0
    %2133 = vmatprep.subr.mxu0 0.0
    %2134 = vmatpush2.msra.mxu0 0.0
    %2135 = vmatprep.subr.mxu0 0.0
    %2136 = vmatpush2.msra.mxu0 0.0
    %2137 = vmatprep.subr.mxu0 0.0
    %2138 = vmatpush2.msra.mxu0 0.0
    %2139 = vmatprep.subr.mxu0 0.0
    %2140 = vmatpush2.msra.mxu0 0.0
    %2141 = vmatprep.subr.mxu0 0.0
    %2142 = vmatpush2.msra.mxu0 0.0
    %2143 = vmatprep.mubr.f32.mxu0 0.0
    %2144 = vmatmul.mubr.f32.gmra.mxu0 %v2074
    %v2145 = vpop.f32.mrf.mxu0
    %v2146 = vadd.f32 0.0, %v2145
    %v2147 = vpop.f32.mrf.mxu0
    %2148 = vmatprep.mubr.f32.mxu0 0.0
    %2149 = vmatmul.mubr.f32.gmra.mxu0 %v2077
    %v2150 = vpop.f32.mrf.mxu0
    %v2151 = vadd.f32 0.0, %v2150
    %v2152 = vpop.f32.mrf.mxu0
    %2153 = vdwg.mxu0
    %2156 = vrot.lane.b32.xlu0 %v2146, 24
    %v2157 = vpop.permute.xlu0 %2156
    %2158 = vrot.lane.b32.xlu0 %v2151, 24
    %v2159 = vpop.permute.xlu0 %2158
    %2162 = vst.msk [vmem:[#allocation2] sm:$0xff] %vm1016, %v2157
    %2163 = vst.msk [vmem:[#allocation2 + $0x8] sm:$0xff] %vm1016, %v2159
    %v2164 = vld [vmem:[#allocation2] sm:$0xff]
    %v2165 = vld [vmem:[#allocation2 + $0x8] sm:$0xff]
    %v2166 = vld [vmem:[#allocation8 + $0x80] sm:$0xff]
    %v2167 = vld [vmem:[#allocation8 + $0x88] sm:$0xff]
    %v2168 = vld [vmem:[#allocation8 + $0x90] sm:$0xff]
    %v2169 = vld [vmem:[#allocation8 + $0x98] sm:$0xff]
    %v2170 = vld [vmem:[#allocation9 + $0x4] sm:$0x1]
    %v2171 = vlaneseq
    %v2172 = vshrl.u32 %v2171, 7
    %v2173 = vsub.s32 0, %v2172
    %v2174 = vrot.slane %v2170, %v2173
    %v2176 = vsel %vm98, %v2164, 0
    %v2179 = vsel %vm98, %v2165, 0
    %2181 = vmatprep.subr.mxu0 0.0
    %2182 = vmatpush1.msra.mxu0 0.0
    %2183 = vmatprep.subr.mxu0 0.0
    %2184 = vmatpush1.msra.mxu0 0.0
    %2185 = vmatprep.subr.mxu0 0.0
    %2186 = vmatpush1.msra.mxu0 0.0
    %2187 = vmatprep.subr.mxu0 0.0
    %2188 = vmatpush1.msra.mxu0 0.0
    %2189 = vmatprep.subr.mxu0 0.0
    %2190 = vmatpush1.msra.mxu0 0.0
    %2191 = vmatprep.subr.mxu0 0.0
    %2192 = vmatpush1.msra.mxu0 0.0
    %2193 = vmatprep.subr.mxu0 0.0
    %2194 = vmatpush1.msra.mxu0 0.0
    %2195 = vmatprep.subr.mxu0 0.0
    %2196 = vmatpush1.msra.mxu0 0.0
    %2197 = vmatprep.subr.mxu0 0.0
    %2198 = vmatpush1.msra.mxu0 0.0
    %2199 = vmatprep.subr.mxu0 0.0
    %2200 = vmatpush1.msra.mxu0 0.0
    %2201 = vmatprep.subr.mxu0 0.0
    %2202 = vmatpush1.msra.mxu0 0.0
    %2203 = vmatprep.subr.mxu0 0.0
    %2204 = vmatpush1.msra.mxu0 0.0
    %2205 = vmatprep.subr.mxu0 0.0
    %2206 = vmatpush1.msra.mxu0 %v2169
    %2207 = vmatprep.subr.mxu0 0.0
    %2208 = vmatpush1.msra.mxu0 %v2168
    %2209 = vmatprep.subr.mxu0 0.0
    %2210 = vmatpush1.msra.mxu0 %v2167
    %2211 = vmatprep.subr.mxu0 0.0
    %2212 = vmatpush1.msra.mxu0 %v2166
    %2213 = vmatprep.subr.mxu0 0.0
    %2214 = vmatpush2.msra.mxu0 0.0
    %2215 = vmatprep.subr.mxu0 0.0
    %2216 = vmatpush2.msra.mxu0 0.0
    %2217 = vmatprep.subr.mxu0 0.0
    %2218 = vmatpush2.msra.mxu0 0.0
    %2219 = vmatprep.subr.mxu0 0.0
    %2220 = vmatpush2.msra.mxu0 0.0
    %2221 = vmatprep.subr.mxu0 0.0
    %2222 = vmatpush2.msra.mxu0 0.0
    %2223 = vmatprep.subr.mxu0 0.0
    %2224 = vmatpush2.msra.mxu0 0.0
    %2225 = vmatprep.subr.mxu0 0.0
    %2226 = vmatpush2.msra.mxu0 0.0
    %2227 = vmatprep.subr.mxu0 0.0
    %2228 = vmatpush2.msra.mxu0 0.0
    %2229 = vmatprep.subr.mxu0 0.0
    %2230 = vmatpush2.msra.mxu0 0.0
    %2231 = vmatprep.subr.mxu0 0.0
    %2232 = vmatpush2.msra.mxu0 0.0
    %2233 = vmatprep.subr.mxu0 0.0
    %2234 = vmatpush2.msra.mxu0 0.0
    %2235 = vmatprep.subr.mxu0 0.0
    %2236 = vmatpush2.msra.mxu0 0.0
    %2237 = vmatprep.subr.mxu0 0.0
    %2238 = vmatpush2.msra.mxu0 0.0
    %2239 = vmatprep.subr.mxu0 0.0
    %2240 = vmatpush2.msra.mxu0 0.0
    %2241 = vmatprep.subr.mxu0 0.0
    %2242 = vmatpush2.msra.mxu0 0.0
    %2243 = vmatprep.subr.mxu0 0.0
    %2244 = vmatpush2.msra.mxu0 0.0
    %2245 = vmatprep.mubr.f32.mxu0 0.0
    %2246 = vmatmul.mubr.f32.gmra.mxu0 %v2176
    %v2247 = vpop.f32.mrf.mxu0
    %v2248 = vadd.f32 %v2174, %v2247
    %v2249 = vpop.f32.mrf.mxu0
    %2250 = vmatprep.mubr.f32.mxu0 0.0
    %2251 = vmatmul.mubr.f32.gmra.mxu0 %v2179
    %v2252 = vpop.f32.mrf.mxu0
    %v2253 = vadd.f32 %v2174, %v2252
    %v2254 = vpop.f32.mrf.mxu0
    %2255 = vdwg.mxu0
    %v2256 = vadd.f32 %v1152, %v2248
    %v2257 = vadd.f32 %v1153, %v2253
    %v2258 = vld [vmem:[#allocation9 + $0x9] sm:$0x1]
    %v2259 = vld [vmem:[#allocation9 + $0xa] sm:$0x1]
    %v2260 = vsel %vm98, %v2256, 0.0
    %2261 = vadd.xlane.f32.xlu0 %v2260
    %v2262 = vpop.xlane.xlu0 %2261
    %v2263 = vsel %vm98, %v2257, 0.0
    %2264 = vadd.xlane.f32.xlu0 %v2263
    %v2265 = vpop.xlane.xlu0 %2264
    %v2266 = vmul.f32 %v2262, %v1121
    %v2267 = vmul.f32 %v2265, %v1121
    %v2268 = vsub.f32 %v2256, %v2266
    %v2269 = vsub.f32 %v2257, %v2267
    %v2270 = vmul.f32 %v2268, %v2268
    %v2271 = vmul.f32 %v2269, %v2269
    %v2272 = vsel %vm98, %v2270, 0.0
    %2273 = vadd.xlane.f32.xlu0 %v2272
    %v2274 = vpop.xlane.xlu0 %2273
    %v2275 = vsel %vm98, %v2271, 0.0
    %2276 = vadd.xlane.f32.xlu0 %v2275
    %v2277 = vpop.xlane.xlu0 %2276
    %v2278 = vmul.f32 %v2274, %v1121
    %v2279 = vmul.f32 %v2277, %v1121
    %v2280 = vadd.f32 %v2278, 1e-05
    %v2281 = vadd.f32 %v2279, 1e-05
    %v2282 = vrsqrt.pop %v2280
    %v2283 = vrsqrt.pop %v2281
    %v2284 = vmul.f32 %v2268, %v2282
    %v2285 = vmul.f32 %v2269, %v2283
    %v2286 = vlaneseq
    %v2287 = vshrl.u32 %v2286, 7
    %v2288 = vsub.s32 0, %v2287
    %v2289 = vrot.slane %v2258, %v2288
    %v2290 = vmul.f32 %v2284, %v2289
    %v2291 = vmul.f32 %v2285, %v2289
    %v2292 = vlaneseq
    %v2293 = vshrl.u32 %v2292, 7
    %v2294 = vsub.s32 0, %v2293
    %v2295 = vrot.slane %v2259, %v2294
    %v2296 = vadd.f32 %v2290, %v2295
    %v2297 = vadd.f32 %v2291, %v2295
    %v2298 = vld [vmem:[#allocation8 + $0xa0] sm:$0xff]
    %v2299 = vld [vmem:[#allocation8 + $0xa8] sm:$0xff]
    %v2300 = vld [vmem:[#allocation8 + $0xb0] sm:$0xff]
    %v2301 = vld [vmem:[#allocation8 + $0xb8] sm:$0xff]
    %v2302 = vld [vmem:[#allocation9 + $0x5] sm:$0x1]
    %v2303 = vlaneseq
    %v2304 = vshrl.u32 %v2303, 7
    %v2305 = vsub.s32 0, %v2304
    %v2306 = vrot.slane %v2302, %v2305
    %v2308 = vsel %vm98, %v2296, 0
    %v2311 = vsel %vm98, %v2297, 0
    %2313 = vmatprep.subr.mxu0 0.0
    %2314 = vmatpush1.msra.mxu0 0.0
    %2315 = vmatprep.subr.mxu0 0.0
    %2316 = vmatpush1.msra.mxu0 0.0
    %2317 = vmatprep.subr.mxu0 0.0
    %2318 = vmatpush1.msra.mxu0 0.0
    %2319 = vmatprep.subr.mxu0 0.0
    %2320 = vmatpush1.msra.mxu0 0.0
    %2321 = vmatprep.subr.mxu0 0.0
    %2322 = vmatpush1.msra.mxu0 0.0
    %2323 = vmatprep.subr.mxu0 0.0
    %2324 = vmatpush1.msra.mxu0 0.0
    %2325 = vmatprep.subr.mxu0 0.0
    %2326 = vmatpush1.msra.mxu0 0.0
    %2327 = vmatprep.subr.mxu0 0.0
    %2328 = vmatpush1.msra.mxu0 0.0
    %2329 = vmatprep.subr.mxu0 0.0
    %2330 = vmatpush1.msra.mxu0 0.0
    %2331 = vmatprep.subr.mxu0 0.0
    %2332 = vmatpush1.msra.mxu0 0.0
    %2333 = vmatprep.subr.mxu0 0.0
    %2334 = vmatpush1.msra.mxu0 0.0
    %2335 = vmatprep.subr.mxu0 0.0
    %2336 = vmatpush1.msra.mxu0 0.0
    %2337 = vmatprep.subr.mxu0 0.0
    %2338 = vmatpush1.msra.mxu0 %v2301
    %2339 = vmatprep.subr.mxu0 0.0
    %2340 = vmatpush1.msra.mxu0 %v2300
    %2341 = vmatprep.subr.mxu0 0.0
    %2342 = vmatpush1.msra.mxu0 %v2299
    %2343 = vmatprep.subr.mxu0 0.0
    %2344 = vmatpush1.msra.mxu0 %v2298
    %2345 = vmatprep.subr.mxu0 0.0
    %2346 = vmatpush2.msra.mxu0 0.0
    %2347 = vmatprep.subr.mxu0 0.0
    %2348 = vmatpush2.msra.mxu0 0.0
    %2349 = vmatprep.subr.mxu0 0.0
    %2350 = vmatpush2.msra.mxu0 0.0
    %2351 = vmatprep.subr.mxu0 0.0
    %2352 = vmatpush2.msra.mxu0 0.0
    %2353 = vmatprep.subr.mxu0 0.0
    %2354 = vmatpush2.msra.mxu0 0.0
    %2355 = vmatprep.subr.mxu0 0.0
    %2356 = vmatpush2.msra.mxu0 0.0
    %2357 = vmatprep.subr.mxu0 0.0
    %2358 = vmatpush2.msra.mxu0 0.0
    %2359 = vmatprep.subr.mxu0 0.0
    %2360 = vmatpush2.msra.mxu0 0.0
    %2361 = vmatprep.subr.mxu0 0.0
    %2362 = vmatpush2.msra.mxu0 0.0
    %2363 = vmatprep.subr.mxu0 0.0
    %2364 = vmatpush2.msra.mxu0 0.0
    %2365 = vmatprep.subr.mxu0 0.0
    %2366 = vmatpush2.msra.mxu0 0.0
    %2367 = vmatprep.subr.mxu0 0.0
    %2368 = vmatpush2.msra.mxu0 0.0
    %2369 = vmatprep.subr.mxu0 0.0
    %2370 = vmatpush2.msra.mxu0 0.0
    %2371 = vmatprep.subr.mxu0 0.0
    %2372 = vmatpush2.msra.mxu0 0.0
    %2373 = vmatprep.subr.mxu0 0.0
    %2374 = vmatpush2.msra.mxu0 0.0
    %2375 = vmatprep.subr.mxu0 0.0
    %2376 = vmatpush2.msra.mxu0 0.0
    %2377 = vmatprep.mubr.f32.mxu0 0.0
    %2378 = vmatmul.mubr.f32.gmra.mxu0 %v2308
    %v2379 = vpop.f32.mrf.mxu0
    %v2380 = vadd.f32 %v2306, %v2379
    %v2381 = vpop.f32.mrf.mxu0
    %2382 = vmatprep.mubr.f32.mxu0 0.0
    %2383 = vmatmul.mubr.f32.gmra.mxu0 %v2311
    %v2384 = vpop.f32.mrf.mxu0
    %v2385 = vadd.f32 %v2306, %v2384
    %v2386 = vpop.f32.mrf.mxu0
    %2387 = vdwg.mxu0
    %v2388 = vmax.f32 %v2380, 0.0
    %v2389 = vmax.f32 %v2385, 0.0
    %v2390 = vld [vmem:[#allocation8 + $0xc0] sm:$0xff]
    %v2391 = vld [vmem:[#allocation8 + $0xc8] sm:$0xff]
    %v2392 = vld [vmem:[#allocation8 + $0xd0] sm:$0xff]
    %v2393 = vld [vmem:[#allocation8 + $0xd8] sm:$0xff]
    %v2394 = vld [vmem:[#allocation8 + $0xe0] sm:$0xff]
    %v2395 = vld [vmem:[#allocation8 + $0xe8] sm:$0xff]
    %v2396 = vld [vmem:[#allocation8 + $0xf0] sm:$0xff]
    %v2397 = vld [vmem:[#allocation8 + $0xf8] sm:$0xff]
    %v2398 = vld [vmem:[#allocation9 + $0x6] sm:$0x1]
    %v2399 = vlaneseq
    %v2400 = vshrl.u32 %v2399, 7
    %v2401 = vsub.s32 0, %v2400
    %v2402 = vrot.slane %v2398, %v2401
    %vm2403 = vcmask 523264
    %v2405 = vsel %vm2403, %v2388, 0
    %v2408 = vsel %vm2403, %v2389, 0
    %2410 = vmatprep.subr.mxu0 0.0
    %2411 = vmatpush1.msra.mxu0 0.0
    %2412 = vmatprep.subr.mxu0 0.0
    %2413 = vmatpush1.msra.mxu0 0.0
    %2414 = vmatprep.subr.mxu0 0.0
    %2415 = vmatpush1.msra.mxu0 0.0
    %2416 = vmatprep.subr.mxu0 0.0
    %2417 = vmatpush1.msra.mxu0 0.0
    %2418 = vmatprep.subr.mxu0 0.0
    %2419 = vmatpush1.msra.mxu0 0.0
    %2420 = vmatprep.subr.mxu0 0.0
    %2421 = vmatpush1.msra.mxu0 0.0
    %2422 = vmatprep.subr.mxu0 0.0
    %2423 = vmatpush1.msra.mxu0 0.0
    %2424 = vmatprep.subr.mxu0 0.0
    %2425 = vmatpush1.msra.mxu0 0.0
    %2426 = vmatprep.subr.mxu0 0.0
    %2427 = vmatpush1.msra.mxu0 %v2397
    %2428 = vmatprep.subr.mxu0 0.0
    %2429 = vmatpush1.msra.mxu0 %v2396
    %2430 = vmatprep.subr.mxu0 0.0
    %2431 = vmatpush1.msra.mxu0 %v2395
    %2432 = vmatprep.subr.mxu0 0.0
    %2433 = vmatpush1.msra.mxu0 %v2394
    %2434 = vmatprep.subr.mxu0 0.0
    %2435 = vmatpush1.msra.mxu0 %v2393
    %2436 = vmatprep.subr.mxu0 0.0
    %2437 = vmatpush1.msra.mxu0 %v2392
    %2438 = vmatprep.subr.mxu0 0.0
    %2439 = vmatpush1.msra.mxu0 %v2391
    %2440 = vmatprep.subr.mxu0 0.0
    %2441 = vmatpush1.msra.mxu0 %v2390
    %2442 = vmatprep.subr.mxu0 0.0
    %2443 = vmatpush2.msra.mxu0 0.0
    %2444 = vmatprep.subr.mxu0 0.0
    %2445 = vmatpush2.msra.mxu0 0.0
    %2446 = vmatprep.subr.mxu0 0.0
    %2447 = vmatpush2.msra.mxu0 0.0
    %2448 = vmatprep.subr.mxu0 0.0
    %2449 = vmatpush2.msra.mxu0 0.0
    %2450 = vmatprep.subr.mxu0 0.0
    %2451 = vmatpush2.msra.mxu0 0.0
    %2452 = vmatprep.subr.mxu0 0.0
    %2453 = vmatpush2.msra.mxu0 0.0
    %2454 = vmatprep.subr.mxu0 0.0
    %2455 = vmatpush2.msra.mxu0 0.0
    %2456 = vmatprep.subr.mxu0 0.0
    %2457 = vmatpush2.msra.mxu0 0.0
    %2458 = vmatprep.subr.mxu0 0.0
    %2459 = vmatpush2.msra.mxu0 0.0
    %2460 = vmatprep.subr.mxu0 0.0
    %2461 = vmatpush2.msra.mxu0 0.0
    %2462 = vmatprep.subr.mxu0 0.0
    %2463 = vmatpush2.msra.mxu0 0.0
    %2464 = vmatprep.subr.mxu0 0.0
    %2465 = vmatpush2.msra.mxu0 0.0
    %2466 = vmatprep.subr.mxu0 0.0
    %2467 = vmatpush2.msra.mxu0 0.0
    %2468 = vmatprep.subr.mxu0 0.0
    %2469 = vmatpush2.msra.mxu0 0.0
    %2470 = vmatprep.subr.mxu0 0.0
    %2471 = vmatpush2.msra.mxu0 0.0
    %2472 = vmatprep.subr.mxu0 0.0
    %2473 = vmatpush2.msra.mxu0 0.0
    %2474 = vmatprep.mubr.f32.mxu0 0.0
    %2475 = vmatmul.mubr.f32.gmra.mxu0 %v2405
    %v2476 = vpop.f32.mrf.mxu0
    %v2477 = vadd.f32 %v2402, %v2476
    %v2478 = vpop.f32.mrf.mxu0
    %2479 = vmatprep.mubr.f32.mxu0 0.0
    %2480 = vmatmul.mubr.f32.gmra.mxu0 %v2408
    %v2481 = vpop.f32.mrf.mxu0
    %v2482 = vadd.f32 %v2402, %v2481
    %v2483 = vpop.f32.mrf.mxu0
    %2484 = vdwg.mxu0
    %v2485 = vadd.f32 %v2296, %v2477
    %v2486 = vadd.f32 %v2297, %v2482
    %v2487 = vld [vmem:[#allocation9 + $0xb] sm:$0x1]
    %v2488 = vld [vmem:[#allocation9 + $0xc] sm:$0x1]
    %v2489 = vsel %vm98, %v2485, 0.0
    %2490 = vadd.xlane.f32.xlu0 %v2489
    %v2491 = vpop.xlane.xlu0 %2490
    %v2492 = vsel %vm98, %v2486, 0.0
    %2493 = vadd.xlane.f32.xlu0 %v2492
    %v2494 = vpop.xlane.xlu0 %2493
    %v2495 = vmul.f32 %v2491, %v1121
    %v2496 = vmul.f32 %v2494, %v1121
    %v2497 = vsub.f32 %v2485, %v2495
    %v2498 = vsub.f32 %v2486, %v2496
    %v2499 = vmul.f32 %v2497, %v2497
    %v2500 = vmul.f32 %v2498, %v2498
    %v2501 = vsel %vm98, %v2499, 0.0
    %2502 = vadd.xlane.f32.xlu0 %v2501
    %v2503 = vpop.xlane.xlu0 %2502
    %v2504 = vsel %vm98, %v2500, 0.0
    %2505 = vadd.xlane.f32.xlu0 %v2504
    %v2506 = vpop.xlane.xlu0 %2505
    %v2507 = vmul.f32 %v2503, %v1121
    %v2508 = vmul.f32 %v2506, %v1121
    %v2509 = vadd.f32 %v2507, 1e-05
    %v2510 = vadd.f32 %v2508, 1e-05
    %v2511 = vrsqrt.pop %v2509
    %v2512 = vrsqrt.pop %v2510
    %v2513 = vmul.f32 %v2497, %v2511
    %v2514 = vmul.f32 %v2498, %v2512
    %v2515 = vlaneseq
    %v2516 = vshrl.u32 %v2515, 7
    %v2517 = vsub.s32 0, %v2516
    %v2518 = vrot.slane %v2487, %v2517
    %v2519 = vmul.f32 %v2513, %v2518
    %v2520 = vmul.f32 %v2514, %v2518
    %v2521 = vlaneseq
    %v2522 = vshrl.u32 %v2521, 7
    %v2523 = vsub.s32 0, %v2522
    %v2524 = vrot.slane %v2488, %v2523
    %v2525 = vadd.f32 %v2519, %v2524
    %v2526 = vadd.f32 %v2520, %v2524
    %2527 = vst.msk [vmem:[#allocation11] sm:$0xff] %vm98, %v2525
    %2528 = vst.msk [vmem:[#allocation11 + $0x8] sm:$0xff] %vm98, %v2526
    // Predicated region
    $region34: #{tpu_custom_call.1} parent=1 // pred_check
      _
    $region35: #{tpu_custom_call.1} parent=1 // pred_check_branch
      %2530 = sbr.rel (0) target = $region37
    $region36: #{tpu_custom_call.1} parent=1 // pred_region
      %s2532 = ssub.s32 256, 256
      %2533 = vsyncadd [#allocation5], %s2532
      %s2534 = sshll.u32 [#allocation11], 4
      %s2535 = int_to_ptr.vmem [resolvable:$true] %s2534
      %2540 = dma.vmem_to_hbm [thread:$0]  %s2535, 256, %s4, [#allocation5], 128, 128, 8
    $region37: #{tpu_custom_call.1} parent=1 // pred_fallthru
      _
    // Predicated region
    $region38: #{tpu_custom_call.1} parent=1 // pred_check
      _
    $region39: #{tpu_custom_call.1} parent=1 // pred_check_branch
      %2542 = sbr.rel (0) target = $region41
    $region40: #{tpu_custom_call.1} parent=1 // pred_region
      %2543 = dma.done [#allocation5], 256
    $region41: #{tpu_custom_call.1} parent=1 // pred_fallthru
      _
    %2544 = vsyncpa [#allocation4], 1
    %2545 = vsyncpa [#allocation7], 1
    %2546 = vsyncpa [#allocation10], 1
    %2547 = vsyncpa [#allocation5], 1

</llo_original>
